<compile_context>
chip_gen: v7x
topology: tpu7x:2x2x1
jax: 0.10.0
libtpu: 0.0.40
codegen_flags: <defaults>
</compile_context>

<pallas_src>
import functools

import jax
import jax.numpy as jnp
from jax import lax
from jax.experimental import pallas as pl
from jax.experimental.pallas import tpu as pltpu
import numpy as np


# -----------------------------------------------------------------------------
# Fused kernel: GRU recurrence + attention pooling + item scores.
# Whole problem fits in VMEM at these sizes -> single grid point.
# Layout: time-major flat rows, row = t*Bp + b.
# -----------------------------------------------------------------------------
def fused_kernel(x_ref, vmask_ref, smask_ref,
                 wih_ref, whh_ref, bx_ref, bhn3_ref,
                 w1_ref, w2_ref, w3_ref, w5k2_ref, w5k1_ref, emb_ref,
                 out_ref,
                 gates_sc, g_sc, *, T, Bp):
    H = whh_ref.shape[0]
    f32 = jnp.float32

    def mm(a, w_ref):
        w = w_ref[...]
        return jnp.dot(a.astype(w.dtype), w, preferred_element_type=f32)

    # ---- Hoisted, gate-fused input projection for ALL time steps: one
    #      (T*Bp, E) @ (E, 3H) MXU op, time-invariant biases folded in
    #      (b_ih + b_hh for r/z, b_ih alone for n).
    gates_sc[...] = mm(x_ref[...], wih_ref) + bx_ref[...]

    whh = whh_ref[...]          # (H, 3H), gate-fused hidden weights
    bhn3 = bhn3_ref[...]        # (1, 3H): [0 | 0 | b_hh_n]

    # ---- GRU recurrence: one MXU push per step on the serial chain.
    #      pack_padded semantics via vmask (hidden frozen, output zeroed on
    #      padded steps, as pad_packed_sequence does).
    def step(t, h):
        row0 = pl.multiple_of(t * Bp, Bp)            # Bp is a multiple of 8
        rows = pl.ds(row0, Bp)
        hh = jnp.dot(h.astype(whh.dtype), whh, preferred_element_type=f32) + bhn3
        gx = gates_sc[rows, :]                       # (Bp, 3H)
        r = jax.nn.sigmoid(gx[:, 0:H] + hh[:, 0:H])
        z = jax.nn.sigmoid(gx[:, H:2 * H] + hh[:, H:2 * H])
        n = jnp.tanh(gx[:, 2 * H:3 * H] + r * hh[:, 2 * H:3 * H])
        h_new = (1.0 - z) * n + z * h
        m = vmask_ref[rows, :]                       # (Bp, 1)
        g_sc[rows, :] = m * h_new                    # gru_out (zeroed when padded)
        return m * h_new + (1.0 - m) * h

    last = lax.fori_loop(0, T, step, jnp.zeros((Bp, H), f32), unroll=True)  # k1

    # ---- Attention pooling: matmuls batched over all T*Bp rows; the time
    #      broadcast of layer2 and the time-sum for k2 run on the VPU/XLU.
    g = g_sc[...]                                    # (T*Bp, H)
    layer1 = mm(g, w1_ref)                           # (T*Bp, H)
    layer2 = mm(last, w2_ref)                        # (Bp, H)
    smask3 = smask_ref[...].reshape(T, Bp, 1)
    act = jax.nn.sigmoid(layer1.reshape(T, Bp, H) + smask3 * layer2[None, :, :])
    w3row = w3_ref[...]                              # (1, H)
    alpha = jnp.sum(act * w3row[None, :, :], axis=-1, keepdims=True)   # (T,Bp,1)
    k2 = jnp.sum(alpha * g.reshape(T, Bp, H), axis=0)                  # (Bp, H)

    # ---- scores = ([k2, k1] @ W5) @ emb^T: contract over E directly against
    #      the (N, E) table (no materialized transpose); (Bp, N) lane-dense.
    kw = mm(k2, w5k2_ref) + mm(last, w5k1_ref)       # (Bp, E), f32
    emb = emb_ref[...]
    out_ref[...] = lax.dot_general(
        kw.astype(emb.dtype), emb,
        dimension_numbers=(((1,), (1,)), ((), ())),
        preferred_element_type=f32)


# -----------------------------------------------------------------------------
# Model wrapper (glue): embedding gather, batch padding, mask construction,
# weight packing/folding; then one pallas_call.
# -----------------------------------------------------------------------------
def model_forward(params, seq, lengths, *, weights_dtype=jnp.float32):
    T, B = seq.shape
    emb = params["emb"]                               # (N, E)
    N, E = emb.shape
    H = params["whh"].shape[-1]
    wd = weights_dtype

    # Pad batch to the 8-sublane tile (padded rows have length 0 / token 0).
    Bp = ((B + 7) // 8) * 8
    pad = Bp - B
    seq_p = jnp.pad(seq, ((0, 0), (0, pad)))          # (T, Bp) int32
    len_p = jnp.pad(lengths, (0, pad))                # (Bp,)   int32

    # Embedding gather (kept in XLA); flat (T*Bp, .) rows, row = t*Bp + b.
    emb_w = emb.astype(wd)
    x = jnp.take(emb_w, seq_p.reshape(-1), axis=0)    # (T*Bp, E)
    t_idx = jnp.arange(T, dtype=jnp.int32)[:, None]
    vmask = (t_idx < len_p[None, :]).astype(jnp.float32).reshape(T * Bp, 1)
    smask = (seq_p > 0).astype(jnp.float32).reshape(T * Bp, 1)

    # Gate-fused GRU weights (one MXU push per step / per projection) and
    # folded biases: r/z get b_ih+b_hh, n gets b_ih on the input side and
    # b_hh_n on the hidden side (inside r * (...)).
    wih_cat = jnp.concatenate([params["wih"][g] for g in range(3)], axis=1).astype(wd)  # (E, 3H)
    whh_cat = jnp.concatenate([params["whh"][g] for g in range(3)], axis=1).astype(wd)  # (H, 3H)
    bx_cat = jnp.concatenate([params["bih"][0] + params["bhh"][0],
                              params["bih"][1] + params["bhh"][1],
                              params["bih"][2]], axis=1)                   # (1, 3H) f32
    zeros_h = jnp.zeros_like(params["bhh"][2])
    bhn3 = jnp.concatenate([zeros_h, zeros_h, params["bhh"][2]], axis=1)   # (1, 3H) f32

    w1 = params["w1t"].astype(wd)                      # (H, H)
    w2 = params["w2t"].astype(wd)                      # (H, H)
    w3row = params["w3t"].reshape(1, H).astype(jnp.float32)   # VPU operand, f32
    w5k2 = params["w5"][:H].astype(wd)                 # (H, E)
    w5k1 = params["w5"][H:].astype(wd)                 # (H, E)

    vspec = pl.BlockSpec(memory_space=pltpu.MemorySpace.VMEM)
    scores_p = pl.pallas_call(
        functools.partial(fused_kernel, T=T, Bp=Bp),
        out_shape=jax.ShapeDtypeStruct((Bp, N), jnp.float32),   # lane-dense N
        in_specs=[vspec] * 13,
        out_specs=vspec,
        scratch_shapes=[pltpu.VMEM((T * Bp, 3 * H), jnp.float32),   # fused gates
                        pltpu.VMEM((T * Bp, H), jnp.float32)],      # gru_out
    )(x, vmask, smask, wih_cat, whh_cat, bx_cat, bhn3,
      w1, w2, w3row, w5k2, w5k1, emb_w)

    return scores_p[:B]                               # drop batch padding


# -----------------------------------------------------------------------------
# Pure-JAX reference (identical math to the PyTorch module) for verification.
# -----------------------------------------------------------------------------
def reference_forward(params, seq, lengths):
    T, B = seq.shape
    emb = params["emb"]
    H = params["w1t"].shape[0]
    x_emb = jnp.take(emb, seq, axis=0)
    h = jnp.zeros((B, H), jnp.float32)
    gru_out = []
    for t in range(T):
        x_t = x_emb[t]
        m = (t < lengths).astype(jnp.float32)[:, None]
        i_r = x_t @ params["wih"][0] + params["bih"][0]
        i_z = x_t @ params["wih"][1] + params["bih"][1]
        i_n = x_t @ params["wih"][2] + params["bih"][2]
        h_r = h @ params["whh"][0] + params["bhh"][0]
        h_z = h @ params["whh"][1] + params["bhh"][1]
        h_n = h @ params["whh"][2] + params["bhh"][2]
        r = jax.nn.sigmoid(i_r + h_r)
        z = jax.nn.sigmoid(i_z + h_z)
        n = jnp.tanh(i_n + r * h_n)
        h_new = (1.0 - z) * n + z * h
        h = m * h_new + (1.0 - m) * h
        gru_out.append(m * h_new)
    gru_out = jnp.stack(gru_out, 0)                        # (T, B, H)
    last = h
    layer2 = last @ params["w2t"]                          # (B, H)
    smask = (seq > 0).astype(jnp.float32)                  # (T, B)
    layer1 = jnp.einsum("tbh,hk->tbk", gru_out, params["w1t"])
    act = jax.nn.sigmoid(layer1 + smask[:, :, None] * layer2[None, :, :])
    alpha = jnp.einsum("tbh,ho->tbo", act, params["w3t"])  # (T, B, 1)
    k2 = jnp.sum(alpha * gru_out, axis=0)                  # (B, H)
    k = jnp.concatenate([k2, last], axis=1)                # (B, 2H)
    proj = emb @ params["w5"].T                            # (N, 2H)
    return k @ proj.T


# -----------------------------------------------------------------------------
def init_params(key, n_items, hidden, emb_dim):
    keys = jax.random.split(key, 10)
    scale = 0.1
    emb = scale * jax.random.normal(keys[0], (n_items, emb_dim), jnp.float32)
    emb = emb.at[0].set(0.0)  # padding_idx=0
    # GRU weights, pre-transposed per gate: wih[g] = W_i{r,z,n}^T (E, H).
    wih = scale * jax.random.normal(keys[1], (3, emb_dim, hidden), jnp.float32)
    whh = scale * jax.random.normal(keys[2], (3, hidden, hidden), jnp.float32)
    bih = scale * jax.random.normal(keys[3], (3, 1, hidden), jnp.float32)
    bhh = scale * jax.random.normal(keys[4], (3, 1, hidden), jnp.float32)
    # Linear layers stored as W^T so application is x @ W^T.
    w1t = scale * jax.random.normal(keys[5], (hidden, hidden), jnp.float32)
    w2t = scale * jax.random.normal(keys[6], (hidden, hidden), jnp.float32)
    w3t = scale * jax.random.normal(keys[7], (hidden, 1), jnp.float32)
    # l5 weight in PyTorch layout (out=2H, in=E).
    w5 = scale * jax.random.normal(keys[8], (2 * hidden, emb_dim), jnp.float32)
    return dict(emb=emb, wih=wih, whh=whh, bih=bih, bhh=bhh,
                w1t=w1t, w2t=w2t, w3t=w3t, w5=w5)


if __name__ == "__main__":
    # Small shapes consistent with the module's forward.
    n_items, hidden, emb_dim = 512, 32, 16
    T, B = 8, 4

    key = jax.random.PRNGKey(0)
    pkey, skey = jax.random.split(key)
    params = init_params(pkey, n_items, hidden, emb_dim)

    # lengths sorted descending (pack_padded_sequence requirement), max == T.
    lengths = jnp.array([8, 6, 5, 3], dtype=jnp.int32)
    t_idx = jnp.arange(T, dtype=jnp.int32)[:, None]
    valid = t_idx < lengths[None, :]
    seq_vals = jax.random.randint(skey, (T, B), 1, n_items, dtype=jnp.int32)
    seq = jnp.where(valid, seq_vals, 0)                     # (T, B), 0-padded

    with jax.default_matmul_precision("highest"):
        ref = reference_forward(params, seq, lengths)

    # f32 path (all generations) -- tightened tolerance (headroom only for
    # MXU pass-count / transcendental differences vs. the XLA reference).
    fwd_f32 = jax.jit(functools.partial(model_forward, weights_dtype=jnp.float32))
    scores = jax.block_until_ready(fwd_f32(params, seq, lengths))
    assert scores.shape == (B, n_items)
    np.testing.assert_allclose(np.asarray(scores), np.asarray(ref),
                               rtol=1e-2, atol=1e-4)

    # bf16 MXU-operand path (v6e/v7x optimization); accumulation stays f32.
    fwd_bf16 = jax.jit(functools.partial(model_forward, weights_dtype=jnp.bfloat16))
    scores_bf16 = jax.block_until_ready(fwd_bf16(params, seq, lengths))
    assert scores_bf16.shape == (B, n_items)
    np.testing.assert_allclose(np.asarray(scores_bf16), np.asarray(ref),
                               rtol=8e-2, atol=8e-3)

    print("KERNEL_OK")
</pallas_src>

<mosaic_0001>
module attributes {stable_mosaic.version = 11 : i64} {
  func.func @fused_kernel(%arg0: memref<64x16xf32, #tpu.memory_space<vmem>>, %arg1: memref<64x1xf32, #tpu.memory_space<vmem>>, %arg2: memref<64x1xf32, #tpu.memory_space<vmem>>, %arg3: memref<16x96xf32, #tpu.memory_space<vmem>>, %arg4: memref<32x96xf32, #tpu.memory_space<vmem>>, %arg5: memref<1x96xf32, #tpu.memory_space<vmem>>, %arg6: memref<1x96xf32, #tpu.memory_space<vmem>>, %arg7: memref<32x32xf32, #tpu.memory_space<vmem>>, %arg8: memref<32x32xf32, #tpu.memory_space<vmem>>, %arg9: memref<1x32xf32, #tpu.memory_space<vmem>>, %arg10: memref<32x16xf32, #tpu.memory_space<vmem>>, %arg11: memref<32x16xf32, #tpu.memory_space<vmem>>, %arg12: memref<512x16xf32, #tpu.memory_space<vmem>>, %arg13: memref<8x512xf32, #tpu.memory_space<vmem>>, %arg14: memref<64x96xf32, #tpu.memory_space<vmem>>, %arg15: memref<64x32xf32, #tpu.memory_space<vmem>>) attributes {dimension_semantics = [], scalar_prefetch = 0 : i64, scratch_operands = 2 : i64, tpu.core_type = #tpu.core_type<tc>} {
    %c0 = arith.constant 0 : index
    %c0_0 = arith.constant 0 : index
    %0 = vector.load %arg0[%c0, %c0_0] : memref<64x16xf32, #tpu.memory_space<vmem>>, vector<64x16xf32>
    %c0_1 = arith.constant 0 : index
    %c0_2 = arith.constant 0 : index
    %1 = vector.load %arg3[%c0_1, %c0_2] : memref<16x96xf32, #tpu.memory_space<vmem>>, vector<16x96xf32>
    %cst = arith.constant dense<0.000000e+00> : vector<64x96xf32>
    %2 = tpu.matmul %0, %1, %cst {dimension_numbers = #tpu.dot_dimension_numbers<[1], [0], [0], [1], [0, 0, 1, 1], [], []>} : vector<64x16xf32>, vector<16x96xf32>, vector<64x96xf32> -> vector<64x96xf32>
    %c0_3 = arith.constant 0 : index
    %c0_4 = arith.constant 0 : index
    %3 = vector.load %arg5[%c0_3, %c0_4] : memref<1x96xf32, #tpu.memory_space<vmem>>, vector<1x96xf32>
    %4 = vector.broadcast %3 : vector<1x96xf32> to vector<64x96xf32>
    %5 = arith.addf %2, %4 : vector<64x96xf32>
    %c0_5 = arith.constant 0 : index
    %c0_6 = arith.constant 0 : index
    %6 = vector.load %arg14[%c0_5, %c0_6] : memref<64x96xf32, #tpu.memory_space<vmem>>, vector<64x96xf32>
    tpu.vector_store %arg14[%c0_5, %c0_6], %5 {strides = array<i32>} : memref<64x96xf32, #tpu.memory_space<vmem>>, vector<64x96xf32>,
    %c0_7 = arith.constant 0 : index
    %c0_8 = arith.constant 0 : index
    %7 = vector.load %arg4[%c0_7, %c0_8] : memref<32x96xf32, #tpu.memory_space<vmem>>, vector<32x96xf32>
    %c0_9 = arith.constant 0 : index
    %c0_10 = arith.constant 0 : index
    %8 = vector.load %arg6[%c0_9, %c0_10] : memref<1x96xf32, #tpu.memory_space<vmem>>, vector<1x96xf32>
    %cst_11 = arith.constant 0.000000e+00 : f32
    %9 = vector.broadcast %cst_11 : f32 to vector<8x32xf32>
    %c0_i32 = arith.constant 0 : i32
    %c8_i32 = arith.constant 8 : i32
    %10 = arith.muli %c0_i32, %c8_i32 : i32
    %11 = tpu.assume_multiple %10, 8 : i32
    %cst_12 = arith.constant dense<0.000000e+00> : vector<8x96xf32>
    %12 = tpu.matmul %9, %7, %cst_12 {dimension_numbers = #tpu.dot_dimension_numbers<[1], [0], [0], [1], [0, 0, 1, 1], [], []>} : vector<8x32xf32>, vector<32x96xf32>, vector<8x96xf32> -> vector<8x96xf32>
    %13 = vector.broadcast %8 : vector<1x96xf32> to vector<8x96xf32>
    %14 = arith.addf %12, %13 : vector<8x96xf32>
    %15 = arith.index_cast %11 : i32 to index
    %c0_13 = arith.constant 0 : index
    %16 = vector.load %arg14[%15, %c0_13] : memref<64x96xf32, #tpu.memory_space<vmem>>, vector<8x96xf32>
    %17 = vector.extract_strided_slice %16 {offsets = [0, 0], sizes = [8, 32], strides = [1, 1]} : vector<8x96xf32> to vector<8x32xf32>
    %18 = vector.extract_strided_slice %14 {offsets = [0, 0], sizes = [8, 32], strides = [1, 1]} : vector<8x96xf32> to vector<8x32xf32>
    %19 = arith.addf %17, %18 : vector<8x32xf32>
    %20 = arith.negf %19 : vector<8x32xf32>
    %21 = math.exp %20 : vector<8x32xf32>
    %cst_14 = arith.constant 1.000000e+00 : f32
    %22 = vector.broadcast %cst_14 : f32 to vector<8x32xf32>
    %23 = arith.addf %22, %21 : vector<8x32xf32>
    %24 = arith.divf %22, %23 : vector<8x32xf32>
    %25 = vector.extract_strided_slice %16 {offsets = [0, 32], sizes = [8, 32], strides = [1, 1]} : vector<8x96xf32> to vector<8x32xf32>
    %26 = vector.extract_strided_slice %14 {offsets = [0, 32], sizes = [8, 32], strides = [1, 1]} : vector<8x96xf32> to vector<8x32xf32>
    %27 = arith.addf %25, %26 : vector<8x32xf32>
    %28 = arith.negf %27 : vector<8x32xf32>
    %29 = math.exp %28 : vector<8x32xf32>
    %cst_15 = arith.constant 1.000000e+00 : f32
    %30 = vector.broadcast %cst_15 : f32 to vector<8x32xf32>
    %31 = arith.addf %30, %29 : vector<8x32xf32>
    %32 = arith.divf %30, %31 : vector<8x32xf32>
    %33 = vector.extract_strided_slice %16 {offsets = [0, 64], sizes = [8, 32], strides = [1, 1]} : vector<8x96xf32> to vector<8x32xf32>
    %34 = vector.extract_strided_slice %14 {offsets = [0, 64], sizes = [8, 32], strides = [1, 1]} : vector<8x96xf32> to vector<8x32xf32>
    %35 = arith.mulf %24, %34 : vector<8x32xf32>
    %36 = arith.addf %33, %35 : vector<8x32xf32>
    %37 = math.tanh %36 : vector<8x32xf32>
    %cst_16 = arith.constant 1.000000e+00 : f32
    %38 = vector.broadcast %cst_16 : f32 to vector<8x32xf32>
    %39 = arith.subf %38, %32 : vector<8x32xf32>
    %40 = arith.mulf %39, %37 : vector<8x32xf32>
    %41 = arith.mulf %32, %9 : vector<8x32xf32>
    %42 = arith.addf %40, %41 : vector<8x32xf32>
    %43 = arith.index_cast %11 : i32 to index
    %c0_17 = arith.constant 0 : index
    %44 = vector.load %arg1[%43, %c0_17] : memref<64x1xf32, #tpu.memory_space<vmem>>, vector<8x1xf32>
    %45 = vector.broadcast %44 : vector<8x1xf32> to vector<8x32xf32>
    %46 = arith.mulf %45, %42 : vector<8x32xf32>
    %47 = arith.index_cast %11 : i32 to index
    %c0_18 = arith.constant 0 : index
    %48 = vector.load %arg15[%47, %c0_18] : memref<64x32xf32, #tpu.memory_space<vmem>>, vector<8x32xf32>
    tpu.vector_store %arg15[%47, %c0_18], %46 {strides = array<i32>} : memref<64x32xf32, #tpu.memory_space<vmem>>, vector<8x32xf32>,
    %49 = vector.broadcast %44 : vector<8x1xf32> to vector<8x32xf32>
    %50 = arith.mulf %49, %42 : vector<8x32xf32>
    %cst_19 = arith.constant 1.000000e+00 : f32
    %51 = vector.broadcast %cst_19 : f32 to vector<8x1xf32>
    %52 = arith.subf %51, %44 : vector<8x1xf32>
    %53 = vector.broadcast %52 : vector<8x1xf32> to vector<8x32xf32>
    %54 = arith.mulf %53, %9 : vector<8x32xf32>
    %55 = arith.addf %50, %54 : vector<8x32xf32>
    %c1_i32 = arith.constant 1 : i32
    %c8_i32_20 = arith.constant 8 : i32
    %56 = arith.muli %c1_i32, %c8_i32_20 : i32
    %57 = tpu.assume_multiple %56, 8 : i32
    %cst_21 = arith.constant dense<0.000000e+00> : vector<8x96xf32>
    %58 = tpu.matmul %55, %7, %cst_21 {dimension_numbers = #tpu.dot_dimension_numbers<[1], [0], [0], [1], [0, 0, 1, 1], [], []>} : vector<8x32xf32>, vector<32x96xf32>, vector<8x96xf32> -> vector<8x96xf32>
    %59 = vector.broadcast %8 : vector<1x96xf32> to vector<8x96xf32>
    %60 = arith.addf %58, %59 : vector<8x96xf32>
    %61 = arith.index_cast %57 : i32 to index
    %c0_22 = arith.constant 0 : index
    %62 = vector.load %arg14[%61, %c0_22] : memref<64x96xf32, #tpu.memory_space<vmem>>, vector<8x96xf32>
    %63 = vector.extract_strided_slice %62 {offsets = [0, 0], sizes = [8, 32], strides = [1, 1]} : vector<8x96xf32> to vector<8x32xf32>
    %64 = vector.extract_strided_slice %60 {offsets = [0, 0], sizes = [8, 32], strides = [1, 1]} : vector<8x96xf32> to vector<8x32xf32>
    %65 = arith.addf %63, %64 : vector<8x32xf32>
    %66 = arith.negf %65 : vector<8x32xf32>
    %67 = math.exp %66 : vector<8x32xf32>
    %cst_23 = arith.constant 1.000000e+00 : f32
    %68 = vector.broadcast %cst_23 : f32 to vector<8x32xf32>
    %69 = arith.addf %68, %67 : vector<8x32xf32>
    %70 = arith.divf %68, %69 : vector<8x32xf32>
    %71 = vector.extract_strided_slice %62 {offsets = [0, 32], sizes = [8, 32], strides = [1, 1]} : vector<8x96xf32> to vector<8x32xf32>
    %72 = vector.extract_strided_slice %60 {offsets = [0, 32], sizes = [8, 32], strides = [1, 1]} : vector<8x96xf32> to vector<8x32xf32>
    %73 = arith.addf %71, %72 : vector<8x32xf32>
    %74 = arith.negf %73 : vector<8x32xf32>
    %75 = math.exp %74 : vector<8x32xf32>
    %cst_24 = arith.constant 1.000000e+00 : f32
    %76 = vector.broadcast %cst_24 : f32 to vector<8x32xf32>
    %77 = arith.addf %76, %75 : vector<8x32xf32>
    %78 = arith.divf %76, %77 : vector<8x32xf32>
    %79 = vector.extract_strided_slice %62 {offsets = [0, 64], sizes = [8, 32], strides = [1, 1]} : vector<8x96xf32> to vector<8x32xf32>
    %80 = vector.extract_strided_slice %60 {offsets = [0, 64], sizes = [8, 32], strides = [1, 1]} : vector<8x96xf32> to vector<8x32xf32>
    %81 = arith.mulf %70, %80 : vector<8x32xf32>
    %82 = arith.addf %79, %81 : vector<8x32xf32>
    %83 = math.tanh %82 : vector<8x32xf32>
    %cst_25 = arith.constant 1.000000e+00 : f32
    %84 = vector.broadcast %cst_25 : f32 to vector<8x32xf32>
    %85 = arith.subf %84, %78 : vector<8x32xf32>
    %86 = arith.mulf %85, %83 : vector<8x32xf32>
    %87 = arith.mulf %78, %55 : vector<8x32xf32>
    %88 = arith.addf %86, %87 : vector<8x32xf32>
    %89 = arith.index_cast %57 : i32 to index
    %c0_26 = arith.constant 0 : index
    %90 = vector.load %arg1[%89, %c0_26] : memref<64x1xf32, #tpu.memory_space<vmem>>, vector<8x1xf32>
    %91 = vector.broadcast %90 : vector<8x1xf32> to vector<8x32xf32>
    %92 = arith.mulf %91, %88 : vector<8x32xf32>
    %93 = arith.index_cast %57 : i32 to index
    %c0_27 = arith.constant 0 : index
    %94 = vector.load %arg15[%93, %c0_27] : memref<64x32xf32, #tpu.memory_space<vmem>>, vector<8x32xf32>
    tpu.vector_store %arg15[%93, %c0_27], %92 {strides = array<i32>} : memref<64x32xf32, #tpu.memory_space<vmem>>, vector<8x32xf32>,
    %95 = vector.broadcast %90 : vector<8x1xf32> to vector<8x32xf32>
    %96 = arith.mulf %95, %88 : vector<8x32xf32>
    %cst_28 = arith.constant 1.000000e+00 : f32
    %97 = vector.broadcast %cst_28 : f32 to vector<8x1xf32>
    %98 = arith.subf %97, %90 : vector<8x1xf32>
    %99 = vector.broadcast %98 : vector<8x1xf32> to vector<8x32xf32>
    %100 = arith.mulf %99, %55 : vector<8x32xf32>
    %101 = arith.addf %96, %100 : vector<8x32xf32>
    %c2_i32 = arith.constant 2 : i32
    %c8_i32_29 = arith.constant 8 : i32
    %102 = arith.muli %c2_i32, %c8_i32_29 : i32
    %103 = tpu.assume_multiple %102, 8 : i32
    %cst_30 = arith.constant dense<0.000000e+00> : vector<8x96xf32>
    %104 = tpu.matmul %101, %7, %cst_30 {dimension_numbers = #tpu.dot_dimension_numbers<[1], [0], [0], [1], [0, 0, 1, 1], [], []>} : vector<8x32xf32>, vector<32x96xf32>, vector<8x96xf32> -> vector<8x96xf32>
    %105 = vector.broadcast %8 : vector<1x96xf32> to vector<8x96xf32>
    %106 = arith.addf %104, %105 : vector<8x96xf32>
    %107 = arith.index_cast %103 : i32 to index
    %c0_31 = arith.constant 0 : index
    %108 = vector.load %arg14[%107, %c0_31] : memref<64x96xf32, #tpu.memory_space<vmem>>, vector<8x96xf32>
    %109 = vector.extract_strided_slice %108 {offsets = [0, 0], sizes = [8, 32], strides = [1, 1]} : vector<8x96xf32> to vector<8x32xf32>
    %110 = vector.extract_strided_slice %106 {offsets = [0, 0], sizes = [8, 32], strides = [1, 1]} : vector<8x96xf32> to vector<8x32xf32>
    %111 = arith.addf %109, %110 : vector<8x32xf32>
    %112 = arith.negf %111 : vector<8x32xf32>
    %113 = math.exp %112 : vector<8x32xf32>
    %cst_32 = arith.constant 1.000000e+00 : f32
    %114 = vector.broadcast %cst_32 : f32 to vector<8x32xf32>
    %115 = arith.addf %114, %113 : vector<8x32xf32>
    %116 = arith.divf %114, %115 : vector<8x32xf32>
    %117 = vector.extract_strided_slice %108 {offsets = [0, 32], sizes = [8, 32], strides = [1, 1]} : vector<8x96xf32> to vector<8x32xf32>
    %118 = vector.extract_strided_slice %106 {offsets = [0, 32], sizes = [8, 32], strides = [1, 1]} : vector<8x96xf32> to vector<8x32xf32>
    %119 = arith.addf %117, %118 : vector<8x32xf32>
    %120 = arith.negf %119 : vector<8x32xf32>
    %121 = math.exp %120 : vector<8x32xf32>
    %cst_33 = arith.constant 1.000000e+00 : f32
    %122 = vector.broadcast %cst_33 : f32 to vector<8x32xf32>
    %123 = arith.addf %122, %121 : vector<8x32xf32>
    %124 = arith.divf %122, %123 : vector<8x32xf32>
    %125 = vector.extract_strided_slice %108 {offsets = [0, 64], sizes = [8, 32], strides = [1, 1]} : vector<8x96xf32> to vector<8x32xf32>
    %126 = vector.extract_strided_slice %106 {offsets = [0, 64], sizes = [8, 32], strides = [1, 1]} : vector<8x96xf32> to vector<8x32xf32>
    %127 = arith.mulf %116, %126 : vector<8x32xf32>
    %128 = arith.addf %125, %127 : vector<8x32xf32>
    %129 = math.tanh %128 : vector<8x32xf32>
    %cst_34 = arith.constant 1.000000e+00 : f32
    %130 = vector.broadcast %cst_34 : f32 to vector<8x32xf32>
    %131 = arith.subf %130, %124 : vector<8x32xf32>
    %132 = arith.mulf %131, %129 : vector<8x32xf32>
    %133 = arith.mulf %124, %101 : vector<8x32xf32>
    %134 = arith.addf %132, %133 : vector<8x32xf32>
    %135 = arith.index_cast %103 : i32 to index
    %c0_35 = arith.constant 0 : index
    %136 = vector.load %arg1[%135, %c0_35] : memref<64x1xf32, #tpu.memory_space<vmem>>, vector<8x1xf32>
    %137 = vector.broadcast %136 : vector<8x1xf32> to vector<8x32xf32>
    %138 = arith.mulf %137, %134 : vector<8x32xf32>
    %139 = arith.index_cast %103 : i32 to index
    %c0_36 = arith.constant 0 : index
    %140 = vector.load %arg15[%139, %c0_36] : memref<64x32xf32, #tpu.memory_space<vmem>>, vector<8x32xf32>
    tpu.vector_store %arg15[%139, %c0_36], %138 {strides = array<i32>} : memref<64x32xf32, #tpu.memory_space<vmem>>, vector<8x32xf32>,
    %141 = vector.broadcast %136 : vector<8x1xf32> to vector<8x32xf32>
    %142 = arith.mulf %141, %134 : vector<8x32xf32>
    %cst_37 = arith.constant 1.000000e+00 : f32
    %143 = vector.broadcast %cst_37 : f32 to vector<8x1xf32>
    %144 = arith.subf %143, %136 : vector<8x1xf32>
    %145 = vector.broadcast %144 : vector<8x1xf32> to vector<8x32xf32>
    %146 = arith.mulf %145, %101 : vector<8x32xf32>
    %147 = arith.addf %142, %146 : vector<8x32xf32>
    %c3_i32 = arith.constant 3 : i32
    %c8_i32_38 = arith.constant 8 : i32
    %148 = arith.muli %c3_i32, %c8_i32_38 : i32
    %149 = tpu.assume_multiple %148, 8 : i32
    %cst_39 = arith.constant dense<0.000000e+00> : vector<8x96xf32>
    %150 = tpu.matmul %147, %7, %cst_39 {dimension_numbers = #tpu.dot_dimension_numbers<[1], [0], [0], [1], [0, 0, 1, 1], [], []>} : vector<8x32xf32>, vector<32x96xf32>, vector<8x96xf32> -> vector<8x96xf32>
    %151 = vector.broadcast %8 : vector<1x96xf32> to vector<8x96xf32>
    %152 = arith.addf %150, %151 : vector<8x96xf32>
    %153 = arith.index_cast %149 : i32 to index
    %c0_40 = arith.constant 0 : index
    %154 = vector.load %arg14[%153, %c0_40] : memref<64x96xf32, #tpu.memory_space<vmem>>, vector<8x96xf32>
    %155 = vector.extract_strided_slice %154 {offsets = [0, 0], sizes = [8, 32], strides = [1, 1]} : vector<8x96xf32> to vector<8x32xf32>
    %156 = vector.extract_strided_slice %152 {offsets = [0, 0], sizes = [8, 32], strides = [1, 1]} : vector<8x96xf32> to vector<8x32xf32>
    %157 = arith.addf %155, %156 : vector<8x32xf32>
    %158 = arith.negf %157 : vector<8x32xf32>
    %159 = math.exp %158 : vector<8x32xf32>
    %cst_41 = arith.constant 1.000000e+00 : f32
    %160 = vector.broadcast %cst_41 : f32 to vector<8x32xf32>
    %161 = arith.addf %160, %159 : vector<8x32xf32>
    %162 = arith.divf %160, %161 : vector<8x32xf32>
    %163 = vector.extract_strided_slice %154 {offsets = [0, 32], sizes = [8, 32], strides = [1, 1]} : vector<8x96xf32> to vector<8x32xf32>
    %164 = vector.extract_strided_slice %152 {offsets = [0, 32], sizes = [8, 32], strides = [1, 1]} : vector<8x96xf32> to vector<8x32xf32>
    %165 = arith.addf %163, %164 : vector<8x32xf32>
    %166 = arith.negf %165 : vector<8x32xf32>
    %167 = math.exp %166 : vector<8x32xf32>
    %cst_42 = arith.constant 1.000000e+00 : f32
    %168 = vector.broadcast %cst_42 : f32 to vector<8x32xf32>
    %169 = arith.addf %168, %167 : vector<8x32xf32>
    %170 = arith.divf %168, %169 : vector<8x32xf32>
    %171 = vector.extract_strided_slice %154 {offsets = [0, 64], sizes = [8, 32], strides = [1, 1]} : vector<8x96xf32> to vector<8x32xf32>
    %172 = vector.extract_strided_slice %152 {offsets = [0, 64], sizes = [8, 32], strides = [1, 1]} : vector<8x96xf32> to vector<8x32xf32>
    %173 = arith.mulf %162, %172 : vector<8x32xf32>
    %174 = arith.addf %171, %173 : vector<8x32xf32>
    %175 = math.tanh %174 : vector<8x32xf32>
    %cst_43 = arith.constant 1.000000e+00 : f32
    %176 = vector.broadcast %cst_43 : f32 to vector<8x32xf32>
    %177 = arith.subf %176, %170 : vector<8x32xf32>
    %178 = arith.mulf %177, %175 : vector<8x32xf32>
    %179 = arith.mulf %170, %147 : vector<8x32xf32>
    %180 = arith.addf %178, %179 : vector<8x32xf32>
    %181 = arith.index_cast %149 : i32 to index
    %c0_44 = arith.constant 0 : index
    %182 = vector.load %arg1[%181, %c0_44] : memref<64x1xf32, #tpu.memory_space<vmem>>, vector<8x1xf32>
    %183 = vector.broadcast %182 : vector<8x1xf32> to vector<8x32xf32>
    %184 = arith.mulf %183, %180 : vector<8x32xf32>
    %185 = arith.index_cast %149 : i32 to index
    %c0_45 = arith.constant 0 : index
    %186 = vector.load %arg15[%185, %c0_45] : memref<64x32xf32, #tpu.memory_space<vmem>>, vector<8x32xf32>
    tpu.vector_store %arg15[%185, %c0_45], %184 {strides = array<i32>} : memref<64x32xf32, #tpu.memory_space<vmem>>, vector<8x32xf32>,
    %187 = vector.broadcast %182 : vector<8x1xf32> to vector<8x32xf32>
    %188 = arith.mulf %187, %180 : vector<8x32xf32>
    %cst_46 = arith.constant 1.000000e+00 : f32
    %189 = vector.broadcast %cst_46 : f32 to vector<8x1xf32>
    %190 = arith.subf %189, %182 : vector<8x1xf32>
    %191 = vector.broadcast %190 : vector<8x1xf32> to vector<8x32xf32>
    %192 = arith.mulf %191, %147 : vector<8x32xf32>
    %193 = arith.addf %188, %192 : vector<8x32xf32>
    %c4_i32 = arith.constant 4 : i32
    %c8_i32_47 = arith.constant 8 : i32
    %194 = arith.muli %c4_i32, %c8_i32_47 : i32
    %195 = tpu.assume_multiple %194, 8 : i32
    %cst_48 = arith.constant dense<0.000000e+00> : vector<8x96xf32>
    %196 = tpu.matmul %193, %7, %cst_48 {dimension_numbers = #tpu.dot_dimension_numbers<[1], [0], [0], [1], [0, 0, 1, 1], [], []>} : vector<8x32xf32>, vector<32x96xf32>, vector<8x96xf32> -> vector<8x96xf32>
    %197 = vector.broadcast %8 : vector<1x96xf32> to vector<8x96xf32>
    %198 = arith.addf %196, %197 : vector<8x96xf32>
    %199 = arith.index_cast %195 : i32 to index
    %c0_49 = arith.constant 0 : index
    %200 = vector.load %arg14[%199, %c0_49] : memref<64x96xf32, #tpu.memory_space<vmem>>, vector<8x96xf32>
    %201 = vector.extract_strided_slice %200 {offsets = [0, 0], sizes = [8, 32], strides = [1, 1]} : vector<8x96xf32> to vector<8x32xf32>
    %202 = vector.extract_strided_slice %198 {offsets = [0, 0], sizes = [8, 32], strides = [1, 1]} : vector<8x96xf32> to vector<8x32xf32>
    %203 = arith.addf %201, %202 : vector<8x32xf32>
    %204 = arith.negf %203 : vector<8x32xf32>
    %205 = math.exp %204 : vector<8x32xf32>
    %cst_50 = arith.constant 1.000000e+00 : f32
    %206 = vector.broadcast %cst_50 : f32 to vector<8x32xf32>
    %207 = arith.addf %206, %205 : vector<8x32xf32>
    %208 = arith.divf %206, %207 : vector<8x32xf32>
    %209 = vector.extract_strided_slice %200 {offsets = [0, 32], sizes = [8, 32], strides = [1, 1]} : vector<8x96xf32> to vector<8x32xf32>
    %210 = vector.extract_strided_slice %198 {offsets = [0, 32], sizes = [8, 32], strides = [1, 1]} : vector<8x96xf32> to vector<8x32xf32>
    %211 = arith.addf %209, %210 : vector<8x32xf32>
    %212 = arith.negf %211 : vector<8x32xf32>
    %213 = math.exp %212 : vector<8x32xf32>
    %cst_51 = arith.constant 1.000000e+00 : f32
    %214 = vector.broadcast %cst_51 : f32 to vector<8x32xf32>
    %215 = arith.addf %214, %213 : vector<8x32xf32>
    %216 = arith.divf %214, %215 : vector<8x32xf32>
    %217 = vector.extract_strided_slice %200 {offsets = [0, 64], sizes = [8, 32], strides = [1, 1]} : vector<8x96xf32> to vector<8x32xf32>
    %218 = vector.extract_strided_slice %198 {offsets = [0, 64], sizes = [8, 32], strides = [1, 1]} : vector<8x96xf32> to vector<8x32xf32>
    %219 = arith.mulf %208, %218 : vector<8x32xf32>
    %220 = arith.addf %217, %219 : vector<8x32xf32>
    %221 = math.tanh %220 : vector<8x32xf32>
    %cst_52 = arith.constant 1.000000e+00 : f32
    %222 = vector.broadcast %cst_52 : f32 to vector<8x32xf32>
    %223 = arith.subf %222, %216 : vector<8x32xf32>
    %224 = arith.mulf %223, %221 : vector<8x32xf32>
    %225 = arith.mulf %216, %193 : vector<8x32xf32>
    %226 = arith.addf %224, %225 : vector<8x32xf32>
    %227 = arith.index_cast %195 : i32 to index
    %c0_53 = arith.constant 0 : index
    %228 = vector.load %arg1[%227, %c0_53] : memref<64x1xf32, #tpu.memory_space<vmem>>, vector<8x1xf32>
    %229 = vector.broadcast %228 : vector<8x1xf32> to vector<8x32xf32>
    %230 = arith.mulf %229, %226 : vector<8x32xf32>
    %231 = arith.index_cast %195 : i32 to index
    %c0_54 = arith.constant 0 : index
    %232 = vector.load %arg15[%231, %c0_54] : memref<64x32xf32, #tpu.memory_space<vmem>>, vector<8x32xf32>
    tpu.vector_store %arg15[%231, %c0_54], %230 {strides = array<i32>} : memref<64x32xf32, #tpu.memory_space<vmem>>, vector<8x32xf32>,
    %233 = vector.broadcast %228 : vector<8x1xf32> to vector<8x32xf32>
    %234 = arith.mulf %233, %226 : vector<8x32xf32>
    %cst_55 = arith.constant 1.000000e+00 : f32
    %235 = vector.broadcast %cst_55 : f32 to vector<8x1xf32>
    %236 = arith.subf %235, %228 : vector<8x1xf32>
    %237 = vector.broadcast %236 : vector<8x1xf32> to vector<8x32xf32>
    %238 = arith.mulf %237, %193 : vector<8x32xf32>
    %239 = arith.addf %234, %238 : vector<8x32xf32>
    %c5_i32 = arith.constant 5 : i32
    %c8_i32_56 = arith.constant 8 : i32
    %240 = arith.muli %c5_i32, %c8_i32_56 : i32
    %241 = tpu.assume_multiple %240, 8 : i32
    %cst_57 = arith.constant dense<0.000000e+00> : vector<8x96xf32>
    %242 = tpu.matmul %239, %7, %cst_57 {dimension_numbers = #tpu.dot_dimension_numbers<[1], [0], [0], [1], [0, 0, 1, 1], [], []>} : vector<8x32xf32>, vector<32x96xf32>, vector<8x96xf32> -> vector<8x96xf32>
    %243 = vector.broadcast %8 : vector<1x96xf32> to vector<8x96xf32>
    %244 = arith.addf %242, %243 : vector<8x96xf32>
    %245 = arith.index_cast %241 : i32 to index
    %c0_58 = arith.constant 0 : index
    %246 = vector.load %arg14[%245, %c0_58] : memref<64x96xf32, #tpu.memory_space<vmem>>, vector<8x96xf32>
    %247 = vector.extract_strided_slice %246 {offsets = [0, 0], sizes = [8, 32], strides = [1, 1]} : vector<8x96xf32> to vector<8x32xf32>
    %248 = vector.extract_strided_slice %244 {offsets = [0, 0], sizes = [8, 32], strides = [1, 1]} : vector<8x96xf32> to vector<8x32xf32>
    %249 = arith.addf %247, %248 : vector<8x32xf32>
    %250 = arith.negf %249 : vector<8x32xf32>
    %251 = math.exp %250 : vector<8x32xf32>
    %cst_59 = arith.constant 1.000000e+00 : f32
    %252 = vector.broadcast %cst_59 : f32 to vector<8x32xf32>
    %253 = arith.addf %252, %251 : vector<8x32xf32>
    %254 = arith.divf %252, %253 : vector<8x32xf32>
    %255 = vector.extract_strided_slice %246 {offsets = [0, 32], sizes = [8, 32], strides = [1, 1]} : vector<8x96xf32> to vector<8x32xf32>
    %256 = vector.extract_strided_slice %244 {offsets = [0, 32], sizes = [8, 32], strides = [1, 1]} : vector<8x96xf32> to vector<8x32xf32>
    %257 = arith.addf %255, %256 : vector<8x32xf32>
    %258 = arith.negf %257 : vector<8x32xf32>
    %259 = math.exp %258 : vector<8x32xf32>
    %cst_60 = arith.constant 1.000000e+00 : f32
    %260 = vector.broadcast %cst_60 : f32 to vector<8x32xf32>
    %261 = arith.addf %260, %259 : vector<8x32xf32>
    %262 = arith.divf %260, %261 : vector<8x32xf32>
    %263 = vector.extract_strided_slice %246 {offsets = [0, 64], sizes = [8, 32], strides = [1, 1]} : vector<8x96xf32> to vector<8x32xf32>
    %264 = vector.extract_strided_slice %244 {offsets = [0, 64], sizes = [8, 32], strides = [1, 1]} : vector<8x96xf32> to vector<8x32xf32>
    %265 = arith.mulf %254, %264 : vector<8x32xf32>
    %266 = arith.addf %263, %265 : vector<8x32xf32>
    %267 = math.tanh %266 : vector<8x32xf32>
    %cst_61 = arith.constant 1.000000e+00 : f32
    %268 = vector.broadcast %cst_61 : f32 to vector<8x32xf32>
    %269 = arith.subf %268, %262 : vector<8x32xf32>
    %270 = arith.mulf %269, %267 : vector<8x32xf32>
    %271 = arith.mulf %262, %239 : vector<8x32xf32>
    %272 = arith.addf %270, %271 : vector<8x32xf32>
    %273 = arith.index_cast %241 : i32 to index
    %c0_62 = arith.constant 0 : index
    %274 = vector.load %arg1[%273, %c0_62] : memref<64x1xf32, #tpu.memory_space<vmem>>, vector<8x1xf32>
    %275 = vector.broadcast %274 : vector<8x1xf32> to vector<8x32xf32>
    %276 = arith.mulf %275, %272 : vector<8x32xf32>
    %277 = arith.index_cast %241 : i32 to index
    %c0_63 = arith.constant 0 : index
    %278 = vector.load %arg15[%277, %c0_63] : memref<64x32xf32, #tpu.memory_space<vmem>>, vector<8x32xf32>
    tpu.vector_store %arg15[%277, %c0_63], %276 {strides = array<i32>} : memref<64x32xf32, #tpu.memory_space<vmem>>, vector<8x32xf32>,
    %279 = vector.broadcast %274 : vector<8x1xf32> to vector<8x32xf32>
    %280 = arith.mulf %279, %272 : vector<8x32xf32>
    %cst_64 = arith.constant 1.000000e+00 : f32
    %281 = vector.broadcast %cst_64 : f32 to vector<8x1xf32>
    %282 = arith.subf %281, %274 : vector<8x1xf32>
    %283 = vector.broadcast %282 : vector<8x1xf32> to vector<8x32xf32>
    %284 = arith.mulf %283, %239 : vector<8x32xf32>
    %285 = arith.addf %280, %284 : vector<8x32xf32>
    %c6_i32 = arith.constant 6 : i32
    %c8_i32_65 = arith.constant 8 : i32
    %286 = arith.muli %c6_i32, %c8_i32_65 : i32
    %287 = tpu.assume_multiple %286, 8 : i32
    %cst_66 = arith.constant dense<0.000000e+00> : vector<8x96xf32>
    %288 = tpu.matmul %285, %7, %cst_66 {dimension_numbers = #tpu.dot_dimension_numbers<[1], [0], [0], [1], [0, 0, 1, 1], [], []>} : vector<8x32xf32>, vector<32x96xf32>, vector<8x96xf32> -> vector<8x96xf32>
    %289 = vector.broadcast %8 : vector<1x96xf32> to vector<8x96xf32>
    %290 = arith.addf %288, %289 : vector<8x96xf32>
    %291 = arith.index_cast %287 : i32 to index
    %c0_67 = arith.constant 0 : index
    %292 = vector.load %arg14[%291, %c0_67] : memref<64x96xf32, #tpu.memory_space<vmem>>, vector<8x96xf32>
    %293 = vector.extract_strided_slice %292 {offsets = [0, 0], sizes = [8, 32], strides = [1, 1]} : vector<8x96xf32> to vector<8x32xf32>
    %294 = vector.extract_strided_slice %290 {offsets = [0, 0], sizes = [8, 32], strides = [1, 1]} : vector<8x96xf32> to vector<8x32xf32>
    %295 = arith.addf %293, %294 : vector<8x32xf32>
    %296 = arith.negf %295 : vector<8x32xf32>
    %297 = math.exp %296 : vector<8x32xf32>
    %cst_68 = arith.constant 1.000000e+00 : f32
    %298 = vector.broadcast %cst_68 : f32 to vector<8x32xf32>
    %299 = arith.addf %298, %297 : vector<8x32xf32>
    %300 = arith.divf %298, %299 : vector<8x32xf32>
    %301 = vector.extract_strided_slice %292 {offsets = [0, 32], sizes = [8, 32], strides = [1, 1]} : vector<8x96xf32> to vector<8x32xf32>
    %302 = vector.extract_strided_slice %290 {offsets = [0, 32], sizes = [8, 32], strides = [1, 1]} : vector<8x96xf32> to vector<8x32xf32>
    %303 = arith.addf %301, %302 : vector<8x32xf32>
    %304 = arith.negf %303 : vector<8x32xf32>
    %305 = math.exp %304 : vector<8x32xf32>
    %cst_69 = arith.constant 1.000000e+00 : f32
    %306 = vector.broadcast %cst_69 : f32 to vector<8x32xf32>
    %307 = arith.addf %306, %305 : vector<8x32xf32>
    %308 = arith.divf %306, %307 : vector<8x32xf32>
    %309 = vector.extract_strided_slice %292 {offsets = [0, 64], sizes = [8, 32], strides = [1, 1]} : vector<8x96xf32> to vector<8x32xf32>
    %310 = vector.extract_strided_slice %290 {offsets = [0, 64], sizes = [8, 32], strides = [1, 1]} : vector<8x96xf32> to vector<8x32xf32>
    %311 = arith.mulf %300, %310 : vector<8x32xf32>
    %312 = arith.addf %309, %311 : vector<8x32xf32>
    %313 = math.tanh %312 : vector<8x32xf32>
    %cst_70 = arith.constant 1.000000e+00 : f32
    %314 = vector.broadcast %cst_70 : f32 to vector<8x32xf32>
    %315 = arith.subf %314, %308 : vector<8x32xf32>
    %316 = arith.mulf %315, %313 : vector<8x32xf32>
    %317 = arith.mulf %308, %285 : vector<8x32xf32>
    %318 = arith.addf %316, %317 : vector<8x32xf32>
    %319 = arith.index_cast %287 : i32 to index
    %c0_71 = arith.constant 0 : index
    %320 = vector.load %arg1[%319, %c0_71] : memref<64x1xf32, #tpu.memory_space<vmem>>, vector<8x1xf32>
    %321 = vector.broadcast %320 : vector<8x1xf32> to vector<8x32xf32>
    %322 = arith.mulf %321, %318 : vector<8x32xf32>
    %323 = arith.index_cast %287 : i32 to index
    %c0_72 = arith.constant 0 : index
    %324 = vector.load %arg15[%323, %c0_72] : memref<64x32xf32, #tpu.memory_space<vmem>>, vector<8x32xf32>
    tpu.vector_store %arg15[%323, %c0_72], %322 {strides = array<i32>} : memref<64x32xf32, #tpu.memory_space<vmem>>, vector<8x32xf32>,
    %325 = vector.broadcast %320 : vector<8x1xf32> to vector<8x32xf32>
    %326 = arith.mulf %325, %318 : vector<8x32xf32>
    %cst_73 = arith.constant 1.000000e+00 : f32
    %327 = vector.broadcast %cst_73 : f32 to vector<8x1xf32>
    %328 = arith.subf %327, %320 : vector<8x1xf32>
    %329 = vector.broadcast %328 : vector<8x1xf32> to vector<8x32xf32>
    %330 = arith.mulf %329, %285 : vector<8x32xf32>
    %331 = arith.addf %326, %330 : vector<8x32xf32>
    %c7_i32 = arith.constant 7 : i32
    %c8_i32_74 = arith.constant 8 : i32
    %332 = arith.muli %c7_i32, %c8_i32_74 : i32
    %333 = tpu.assume_multiple %332, 8 : i32
    %cst_75 = arith.constant dense<0.000000e+00> : vector<8x96xf32>
    %334 = tpu.matmul %331, %7, %cst_75 {dimension_numbers = #tpu.dot_dimension_numbers<[1], [0], [0], [1], [0, 0, 1, 1], [], []>} : vector<8x32xf32>, vector<32x96xf32>, vector<8x96xf32> -> vector<8x96xf32>
    %335 = vector.broadcast %8 : vector<1x96xf32> to vector<8x96xf32>
    %336 = arith.addf %334, %335 : vector<8x96xf32>
    %337 = arith.index_cast %333 : i32 to index
    %c0_76 = arith.constant 0 : index
    %338 = vector.load %arg14[%337, %c0_76] : memref<64x96xf32, #tpu.memory_space<vmem>>, vector<8x96xf32>
    %339 = vector.extract_strided_slice %338 {offsets = [0, 0], sizes = [8, 32], strides = [1, 1]} : vector<8x96xf32> to vector<8x32xf32>
    %340 = vector.extract_strided_slice %336 {offsets = [0, 0], sizes = [8, 32], strides = [1, 1]} : vector<8x96xf32> to vector<8x32xf32>
    %341 = arith.addf %339, %340 : vector<8x32xf32>
    %342 = arith.negf %341 : vector<8x32xf32>
    %343 = math.exp %342 : vector<8x32xf32>
    %cst_77 = arith.constant 1.000000e+00 : f32
    %344 = vector.broadcast %cst_77 : f32 to vector<8x32xf32>
    %345 = arith.addf %344, %343 : vector<8x32xf32>
    %346 = arith.divf %344, %345 : vector<8x32xf32>
    %347 = vector.extract_strided_slice %338 {offsets = [0, 32], sizes = [8, 32], strides = [1, 1]} : vector<8x96xf32> to vector<8x32xf32>
    %348 = vector.extract_strided_slice %336 {offsets = [0, 32], sizes = [8, 32], strides = [1, 1]} : vector<8x96xf32> to vector<8x32xf32>
    %349 = arith.addf %347, %348 : vector<8x32xf32>
    %350 = arith.negf %349 : vector<8x32xf32>
    %351 = math.exp %350 : vector<8x32xf32>
    %cst_78 = arith.constant 1.000000e+00 : f32
    %352 = vector.broadcast %cst_78 : f32 to vector<8x32xf32>
    %353 = arith.addf %352, %351 : vector<8x32xf32>
    %354 = arith.divf %352, %353 : vector<8x32xf32>
    %355 = vector.extract_strided_slice %338 {offsets = [0, 64], sizes = [8, 32], strides = [1, 1]} : vector<8x96xf32> to vector<8x32xf32>
    %356 = vector.extract_strided_slice %336 {offsets = [0, 64], sizes = [8, 32], strides = [1, 1]} : vector<8x96xf32> to vector<8x32xf32>
    %357 = arith.mulf %346, %356 : vector<8x32xf32>
    %358 = arith.addf %355, %357 : vector<8x32xf32>
    %359 = math.tanh %358 : vector<8x32xf32>
    %cst_79 = arith.constant 1.000000e+00 : f32
    %360 = vector.broadcast %cst_79 : f32 to vector<8x32xf32>
    %361 = arith.subf %360, %354 : vector<8x32xf32>
    %362 = arith.mulf %361, %359 : vector<8x32xf32>
    %363 = arith.mulf %354, %331 : vector<8x32xf32>
    %364 = arith.addf %362, %363 : vector<8x32xf32>
    %365 = arith.index_cast %333 : i32 to index
    %c0_80 = arith.constant 0 : index
    %366 = vector.load %arg1[%365, %c0_80] : memref<64x1xf32, #tpu.memory_space<vmem>>, vector<8x1xf32>
    %367 = vector.broadcast %366 : vector<8x1xf32> to vector<8x32xf32>
    %368 = arith.mulf %367, %364 : vector<8x32xf32>
    %369 = arith.index_cast %333 : i32 to index
    %c0_81 = arith.constant 0 : index
    %370 = vector.load %arg15[%369, %c0_81] : memref<64x32xf32, #tpu.memory_space<vmem>>, vector<8x32xf32>
    tpu.vector_store %arg15[%369, %c0_81], %368 {strides = array<i32>} : memref<64x32xf32, #tpu.memory_space<vmem>>, vector<8x32xf32>,
    %371 = vector.broadcast %366 : vector<8x1xf32> to vector<8x32xf32>
    %372 = arith.mulf %371, %364 : vector<8x32xf32>
    %cst_82 = arith.constant 1.000000e+00 : f32
    %373 = vector.broadcast %cst_82 : f32 to vector<8x1xf32>
    %374 = arith.subf %373, %366 : vector<8x1xf32>
    %375 = vector.broadcast %374 : vector<8x1xf32> to vector<8x32xf32>
    %376 = arith.mulf %375, %331 : vector<8x32xf32>
    %377 = arith.addf %372, %376 : vector<8x32xf32>
    %c8_i32_83 = arith.constant 8 : i32
    %c0_84 = arith.constant 0 : index
    %c0_85 = arith.constant 0 : index
    %378 = vector.load %arg15[%c0_84, %c0_85] : memref<64x32xf32, #tpu.memory_space<vmem>>, vector<64x32xf32>
    %c0_86 = arith.constant 0 : index
    %c0_87 = arith.constant 0 : index
    %379 = vector.load %arg7[%c0_86, %c0_87] : memref<32x32xf32, #tpu.memory_space<vmem>>, vector<32x32xf32>
    %cst_88 = arith.constant dense<0.000000e+00> : vector<64x32xf32>
    %380 = tpu.matmul %378, %379, %cst_88 {dimension_numbers = #tpu.dot_dimension_numbers<[1], [0], [0], [1], [0, 0, 1, 1], [], []>} : vector<64x32xf32>, vector<32x32xf32>, vector<64x32xf32> -> vector<64x32xf32>
    %c0_89 = arith.constant 0 : index
    %c0_90 = arith.constant 0 : index
    %381 = vector.load %arg8[%c0_89, %c0_90] : memref<32x32xf32, #tpu.memory_space<vmem>>, vector<32x32xf32>
    %cst_91 = arith.constant dense<0.000000e+00> : vector<8x32xf32>
    %382 = tpu.matmul %377, %381, %cst_91 {dimension_numbers = #tpu.dot_dimension_numbers<[1], [0], [0], [1], [0, 0, 1, 1], [], []>} : vector<8x32xf32>, vector<32x32xf32>, vector<8x32xf32> -> vector<8x32xf32>
    %c0_92 = arith.constant 0 : index
    %c0_93 = arith.constant 0 : index
    %383 = vector.load %arg2[%c0_92, %c0_93] : memref<64x1xf32, #tpu.memory_space<vmem>>, vector<64x1xf32>
    %384 = vector.shape_cast %383 : vector<64x1xf32> to vector<8x8x1xf32>
    %385 = vector.shape_cast %380 : vector<64x32xf32> to vector<8x8x32xf32>
    %386 = vector.shape_cast %382 : vector<8x32xf32> to vector<1x8x32xf32>
    %387 = vector.broadcast %384 : vector<8x8x1xf32> to vector<8x8x32xf32>
    %388 = vector.broadcast %386 : vector<1x8x32xf32> to vector<8x8x32xf32>
    %389 = arith.mulf %387, %388 : vector<8x8x32xf32>
    %390 = arith.addf %385, %389 : vector<8x8x32xf32>
    %391 = arith.negf %390 : vector<8x8x32xf32>
    %392 = math.exp %391 : vector<8x8x32xf32>
    %cst_94 = arith.constant 1.000000e+00 : f32
    %393 = vector.broadcast %cst_94 : f32 to vector<8x8x32xf32>
    %394 = arith.addf %393, %392 : vector<8x8x32xf32>
    %395 = arith.divf %393, %394 : vector<8x8x32xf32>
    %c0_95 = arith.constant 0 : index
    %c0_96 = arith.constant 0 : index
    %396 = vector.load %arg9[%c0_95, %c0_96] : memref<1x32xf32, #tpu.memory_space<vmem>>, vector<1x32xf32>
    %397 = vector.shape_cast %396 : vector<1x32xf32> to vector<1x1x32xf32>
    %398 = vector.broadcast %397 : vector<1x1x32xf32> to vector<8x8x32xf32>
    %399 = arith.mulf %395, %398 : vector<8x8x32xf32>
    %cst_97 = arith.constant dense<0.000000e+00> : vector<8x8xf32>
    %400 = vector.multi_reduction <add>, %399, %cst_97 [2] : vector<8x8x32xf32> to vector<8x8xf32>
    %401 = vector.shape_cast %400 : vector<8x8xf32> to vector<8x8x1xf32>
    %402 = vector.shape_cast %378 : vector<64x32xf32> to vector<8x8x32xf32>
    %403 = vector.broadcast %401 : vector<8x8x1xf32> to vector<8x8x32xf32>
    %404 = arith.mulf %403, %402 : vector<8x8x32xf32>
    %cst_98 = arith.constant dense<0.000000e+00> : vector<8x32xf32>
    %405 = vector.multi_reduction <add>, %404, %cst_98 [0] : vector<8x8x32xf32> to vector<8x32xf32>
    %c0_99 = arith.constant 0 : index
    %c0_100 = arith.constant 0 : index
    %406 = vector.load %arg10[%c0_99, %c0_100] : memref<32x16xf32, #tpu.memory_space<vmem>>, vector<32x16xf32>
    %cst_101 = arith.constant dense<0.000000e+00> : vector<8x16xf32>
    %407 = tpu.matmul %405, %406, %cst_101 {dimension_numbers = #tpu.dot_dimension_numbers<[1], [0], [0], [1], [0, 0, 1, 1], [], []>} : vector<8x32xf32>, vector<32x16xf32>, vector<8x16xf32> -> vector<8x16xf32>
    %c0_102 = arith.constant 0 : index
    %c0_103 = arith.constant 0 : index
    %408 = vector.load %arg11[%c0_102, %c0_103] : memref<32x16xf32, #tpu.memory_space<vmem>>, vector<32x16xf32>
    %cst_104 = arith.constant dense<0.000000e+00> : vector<8x16xf32>
    %409 = tpu.matmul %377, %408, %cst_104 {dimension_numbers = #tpu.dot_dimension_numbers<[1], [0], [0], [1], [0, 0, 1, 1], [], []>} : vector<8x32xf32>, vector<32x16xf32>, vector<8x16xf32> -> vector<8x16xf32>
    %410 = arith.addf %407, %409 : vector<8x16xf32>
    %c0_105 = arith.constant 0 : index
    %c0_106 = arith.constant 0 : index
    %411 = vector.load %arg12[%c0_105, %c0_106] : memref<512x16xf32, #tpu.memory_space<vmem>>, vector<512x16xf32>
    %cst_107 = arith.constant dense<0.000000e+00> : vector<8x512xf32>
    %412 = tpu.matmul %410, %411, %cst_107 {dimension_numbers = #tpu.dot_dimension_numbers<[1], [1], [0], [0], [0, 0, 1, 0], [], []>} : vector<8x16xf32>, vector<512x16xf32>, vector<8x512xf32> -> vector<8x512xf32>
    %c0_108 = arith.constant 0 : index
    %c0_109 = arith.constant 0 : index
    %413 = vector.load %arg13[%c0_108, %c0_109] : memref<8x512xf32, #tpu.memory_space<vmem>>, vector<8x512xf32>
    tpu.vector_store %arg13[%c0_108, %c0_109], %412 {strides = array<i32>} : memref<8x512xf32, #tpu.memory_space<vmem>>, vector<8x512xf32>,
    return
  }
}

</mosaic_0001>

<llo_original>
// kernel: model_forward.1
$region0: #{model_forward.1}
  #allocation0 [shape = 'u32[]', space=smem, size = 0x4, offset = 0x4, fixed_abs, tag = 'smem constant byte address 0x4 - core index']
  #allocation1 [shape = 'u32[144,128]{1,0:T(1,128)}', space=vmem, size = 0x12000, scoped, tag = 'internal scratch']
  #allocation2 [shape = 'f32[64,96]{1,0:T(8,128)}', space=vmem, size = 0x8000, scoped, tag = 'scratch operand']
  #allocation3 [shape = 'f32[64,32]{1,0:T(8,128)}', space=vmem, size = 0x8000, scoped, tag = 'scratch operand']
  %s0 = inlined_call_operand.vmem [shape: f32[64,16], index: 0, kind: input, shape index: {}]
  %s1 = inlined_call_operand.vmem [shape: f32[64,1], index: 1, kind: input, shape index: {}]
  %s2 = inlined_call_operand.vmem [shape: f32[64,1], index: 2, kind: input, shape index: {}]
  %s3 = inlined_call_operand.vmem [shape: f32[16,96], index: 3, kind: input, shape index: {}]
  %s4 = inlined_call_operand.vmem [shape: f32[32,96], index: 4, kind: input, shape index: {}]
  %s5 = inlined_call_operand.vmem [shape: f32[1,96], index: 5, kind: input, shape index: {}]
  %s6 = inlined_call_operand.vmem [shape: f32[1,96], index: 6, kind: input, shape index: {}]
  %s7 = inlined_call_operand.vmem [shape: f32[32,32], index: 7, kind: input, shape index: {}]
  %s8 = inlined_call_operand.vmem [shape: f32[32,32], index: 8, kind: input, shape index: {}]
  %s9 = inlined_call_operand.vmem [shape: f32[1,32], index: 9, kind: input, shape index: {}]
  %s10 = inlined_call_operand.vmem [shape: f32[32,16], index: 10, kind: input, shape index: {}]
  %s11 = inlined_call_operand.vmem [shape: f32[32,16], index: 11, kind: input, shape index: {}]
  %s12 = inlined_call_operand.vmem [shape: f32[512,16], index: 12, kind: input, shape index: {}]
  %s13 = inlined_call_operand.vmem [shape: f32[8,512], index: 13, kind: output, shape index: {}]
  %s14 = sld [smem:[#allocation0]]
  $region62: #{model_forward.1} parent=0
    _
  %s16 = ssub.s32 1, %s14
  %s17 = scalar_select 0, %s16, %s14
  // Predicated region
  $region2: #{model_forward.1} parent=0 // pred_check
    _
  $region3: #{model_forward.1} parent=0 // pred_check_branch
    %19 = sbr.rel (0) target = $region5
  $region4: #{model_forward.1} parent=0 // pred_region
    _
  $region5: #{model_forward.1} parent=0 // pred_fallthru
    _
  // Predicated region
  $region6: #{model_forward.1} parent=0 // pred_check
    _
  $region7: #{model_forward.1} parent=0 // pred_check_branch
    %21 = sbr.rel (0) target = $region9
  $region8: #{model_forward.1} parent=0 // pred_region
    _
  $region9: #{model_forward.1} parent=0 // pred_fallthru
    _
  // Predicated region
  $region10: #{model_forward.1} parent=0 // pred_check
    _
  $region11: #{model_forward.1} parent=0 // pred_check_branch
    %23 = sbr.rel (0) target = $region13
  $region12: #{model_forward.1} parent=0 // pred_region
    _
  $region13: #{model_forward.1} parent=0 // pred_fallthru
    _
  // Predicated region
  $region14: #{model_forward.1} parent=0 // pred_check
    _
  $region15: #{model_forward.1} parent=0 // pred_check_branch
    %25 = sbr.rel (0) target = $region17
  $region16: #{model_forward.1} parent=0 // pred_region
    _
  $region17: #{model_forward.1} parent=0 // pred_fallthru
    _
  // Predicated region
  $region18: #{model_forward.1} parent=0 // pred_check
    _
  $region19: #{model_forward.1} parent=0 // pred_check_branch
    %27 = sbr.rel (0) target = $region21
  $region20: #{model_forward.1} parent=0 // pred_region
    _
  $region21: #{model_forward.1} parent=0 // pred_fallthru
    _
  // Predicated region
  $region22: #{model_forward.1} parent=0 // pred_check
    _
  $region23: #{model_forward.1} parent=0 // pred_check_branch
    %29 = sbr.rel (0) target = $region25
  $region24: #{model_forward.1} parent=0 // pred_region
    _
  $region25: #{model_forward.1} parent=0 // pred_fallthru
    _
  // Predicated region
  $region26: #{model_forward.1} parent=0 // pred_check
    _
  $region27: #{model_forward.1} parent=0 // pred_check_branch
    %31 = sbr.rel (0) target = $region29
  $region28: #{model_forward.1} parent=0 // pred_region
    _
  $region29: #{model_forward.1} parent=0 // pred_fallthru
    _
  // Predicated region
  $region30: #{model_forward.1} parent=0 // pred_check
    _
  $region31: #{model_forward.1} parent=0 // pred_check_branch
    %33 = sbr.rel (0) target = $region33
  $region32: #{model_forward.1} parent=0 // pred_region
    _
  $region33: #{model_forward.1} parent=0 // pred_fallthru
    _
  // Predicated region
  $region34: #{model_forward.1} parent=0 // pred_check
    _
  $region35: #{model_forward.1} parent=0 // pred_check_branch
    %35 = sbr.rel (0) target = $region37
  $region36: #{model_forward.1} parent=0 // pred_region
    _
  $region37: #{model_forward.1} parent=0 // pred_fallthru
    _
  // Predicated region
  $region38: #{model_forward.1} parent=0 // pred_check
    _
  $region39: #{model_forward.1} parent=0 // pred_check_branch
    %37 = sbr.rel (0) target = $region41
  $region40: #{model_forward.1} parent=0 // pred_region
    _
  $region41: #{model_forward.1} parent=0 // pred_fallthru
    _
  // Predicated region
  $region42: #{model_forward.1} parent=0 // pred_check
    _
  $region43: #{model_forward.1} parent=0 // pred_check_branch
    %39 = sbr.rel (0) target = $region45
  $region44: #{model_forward.1} parent=0 // pred_region
    _
  $region45: #{model_forward.1} parent=0 // pred_fallthru
    _
  // Predicated region
  $region46: #{model_forward.1} parent=0 // pred_check
    _
  $region47: #{model_forward.1} parent=0 // pred_check_branch
    %41 = sbr.rel (0) target = $region49
  $region48: #{model_forward.1} parent=0 // pred_region
    _
  $region49: #{model_forward.1} parent=0 // pred_fallthru
    _
  // Predicated region
  $region50: #{model_forward.1} parent=0 // pred_check
    _
  $region51: #{model_forward.1} parent=0 // pred_check_branch
    %43 = sbr.rel (0) target = $region53
  $region52: #{model_forward.1} parent=0 // pred_region
    _
  $region53: #{model_forward.1} parent=0 // pred_fallthru
    _
  %v44 = vld [vmem:[%s0] sm:$0xff]
  %v45 = vld [vmem:[%s0 + $0x8] sm:$0xff]
  %v46 = vld [vmem:[%s0 + $0x10] sm:$0xff]
  %v47 = vld [vmem:[%s0 + $0x18] sm:$0xff]
  %v48 = vld [vmem:[%s0 + $0x20] sm:$0xff]
  %v49 = vld [vmem:[%s0 + $0x28] sm:$0xff]
  %v50 = vld [vmem:[%s0 + $0x30] sm:$0xff]
  %v51 = vld [vmem:[%s0 + $0x38] sm:$0xff]
  %v52 = vld [vmem:[%s3] sm:$0xff]
  %v53 = vld [vmem:[%s3 + $0x8] sm:$0xff]
  %v54 = vld [vmem:[%s5] sm:$0x1]
  %v56 = vlaneseq
  %v57 = vshrl.u32 %v56, 7
  %v58 = vsub.s32 0, %v57
  %v59 = vrot.slane %v54, %v58
  %vm61 = vcmask 130048
  %v63 = vsel %vm61, %v44, 0
  %v66 = vsel %vm61, %v45, 0
  %v69 = vsel %vm61, %v46, 0
  %v72 = vsel %vm61, %v47, 0
  %v75 = vsel %vm61, %v48, 0
  %v78 = vsel %vm61, %v49, 0
  %v81 = vsel %vm61, %v50, 0
  %v84 = vsel %vm61, %v51, 0
  %86 = vmatprep.subr.mxu0 0.0
  %87 = vmatpush1.msra.mxu0 %v52
  %88 = vmatprep.subr.mxu0 0.0
  %89 = vmatpush1.msra.mxu0 %v53
  %90 = vmatprep.subr.mxu0 0.0
  %91 = vmatpush1.msra.mxu0 0.0
  %92 = vmatprep.subr.mxu0 0.0
  %93 = vmatpush1.msra.mxu0 0.0
  %94 = vmatprep.subr.mxu0 0.0
  %95 = vmatpush1.msra.mxu0 0.0
  %96 = vmatprep.subr.mxu0 0.0
  %97 = vmatpush1.msra.mxu0 0.0
  %98 = vmatprep.subr.mxu0 0.0
  %99 = vmatpush1.msra.mxu0 0.0
  %100 = vmatprep.subr.mxu0 0.0
  %101 = vmatpush1.msra.mxu0 0.0
  %102 = vmatprep.subr.mxu0 0.0
  %103 = vmatpush1.msra.mxu0 0.0
  %104 = vmatprep.subr.mxu0 0.0
  %105 = vmatpush1.msra.mxu0 0.0
  %106 = vmatprep.subr.mxu0 0.0
  %107 = vmatpush1.msra.mxu0 0.0
  %108 = vmatprep.subr.mxu0 0.0
  %109 = vmatpush1.msra.mxu0 0.0
  %110 = vmatprep.subr.mxu0 0.0
  %111 = vmatpush1.msra.mxu0 0.0
  %112 = vmatprep.subr.mxu0 0.0
  %113 = vmatpush1.msra.mxu0 0.0
  %114 = vmatprep.subr.mxu0 0.0
  %115 = vmatpush1.msra.mxu0 0.0
  %116 = vmatprep.subr.mxu0 0.0
  %117 = vmatpush1.msra.mxu0 0.0
  %118 = vmatprep.subr.mxu0 0.0
  %119 = vmatpush1.msra.mxu0 0.0
  %120 = vmatprep.subr.mxu0 0.0
  %121 = vmatpush1.msra.mxu0 0.0
  %122 = vmatprep.subr.mxu0 0.0
  %123 = vmatpush1.msra.mxu0 0.0
  %124 = vmatprep.subr.mxu0 0.0
  %125 = vmatpush1.msra.mxu0 0.0
  %126 = vmatprep.subr.mxu0 0.0
  %127 = vmatpush1.msra.mxu0 0.0
  %128 = vmatprep.subr.mxu0 0.0
  %129 = vmatpush1.msra.mxu0 0.0
  %130 = vmatprep.subr.mxu0 0.0
  %131 = vmatpush1.msra.mxu0 0.0
  %132 = vmatprep.subr.mxu0 0.0
  %133 = vmatpush1.msra.mxu0 0.0
  %134 = vmatprep.subr.mxu0 0.0
  %135 = vmatpush1.msra.mxu0 0.0
  %136 = vmatprep.subr.mxu0 0.0
  %137 = vmatpush1.msra.mxu0 0.0
  %138 = vmatprep.subr.mxu0 0.0
  %139 = vmatpush1.msra.mxu0 0.0
  %140 = vmatprep.subr.mxu0 0.0
  %141 = vmatpush1.msra.mxu0 0.0
  %142 = vmatprep.subr.mxu0 0.0
  %143 = vmatpush1.msra.mxu0 0.0
  %144 = vmatprep.subr.mxu0 0.0
  %145 = vmatpush1.msra.mxu0 0.0
  %146 = vmatprep.subr.mxu0 0.0
  %147 = vmatpush1.msra.mxu0 0.0
  %148 = vmatprep.subr.mxu0 0.0
  %149 = vmatpush1.msra.mxu0 0.0
  %150 = vmatprep.mubr.f32.mxu0 0.0
  %151 = vmatmul.mubr.f32.gmra.mrb[0].mxu0 %v63
  %v152 = vpop.f32.mrb[0].mxu0
  %v153 = vadd.f32 %v59, %v152
  %v154 = vpop.f32.mrb[0].mxu0
  %155 = vmatprep.mubr.f32.mxu0 0.0
  %156 = vmatmul.mubr.f32.gmra.mrb[0].mxu0 %v66
  %v157 = vpop.f32.mrb[0].mxu0
  %v158 = vadd.f32 %v59, %v157
  %v159 = vpop.f32.mrb[0].mxu0
  %160 = vmatprep.mubr.f32.mxu0 0.0
  %161 = vmatmul.mubr.f32.gmra.mrb[0].mxu0 %v69
  %v162 = vpop.f32.mrb[0].mxu0
  %v163 = vadd.f32 %v59, %v162
  %v164 = vpop.f32.mrb[0].mxu0
  %165 = vmatprep.mubr.f32.mxu0 0.0
  %166 = vmatmul.mubr.f32.gmra.mrb[0].mxu0 %v72
  %v167 = vpop.f32.mrb[0].mxu0
  %v168 = vadd.f32 %v59, %v167
  %v169 = vpop.f32.mrb[0].mxu0
  %170 = vmatprep.mubr.f32.mxu0 0.0
  %171 = vmatmul.mubr.f32.gmra.mrb[0].mxu0 %v75
  %v172 = vpop.f32.mrb[0].mxu0
  %v173 = vadd.f32 %v59, %v172
  %v174 = vpop.f32.mrb[0].mxu0
  %175 = vmatprep.mubr.f32.mxu0 0.0
  %176 = vmatmul.mubr.f32.gmra.mrb[0].mxu0 %v78
  %v177 = vpop.f32.mrb[0].mxu0
  %v178 = vadd.f32 %v59, %v177
  %v179 = vpop.f32.mrb[0].mxu0
  %180 = vmatprep.mubr.f32.mxu0 0.0
  %181 = vmatmul.mubr.f32.gmra.mrb[0].mxu0 %v81
  %v182 = vpop.f32.mrb[0].mxu0
  %v183 = vadd.f32 %v59, %v182
  %v184 = vpop.f32.mrb[0].mxu0
  %185 = vmatprep.mubr.f32.mxu0 0.0
  %186 = vmatmul.mubr.f32.gmra.mrb[0].mxu0 %v84
  %v187 = vpop.f32.mrb[0].mxu0
  %v188 = vadd.f32 %v59, %v187
  %v189 = vpop.f32.mrb[0].mxu0
  %190 = vdwg.mxu0
  %vm191 = vcmask 785408
  %192 = vst.msk [vmem:[#allocation2] sm:$0xff] %vm191, %v153
  %193 = vst.msk [vmem:[#allocation2 + $0x8] sm:$0xff] %vm191, %v158
  %194 = vst.msk [vmem:[#allocation2 + $0x10] sm:$0xff] %vm191, %v163
  %195 = vst.msk [vmem:[#allocation2 + $0x18] sm:$0xff] %vm191, %v168
  %196 = vst.msk [vmem:[#allocation2 + $0x20] sm:$0xff] %vm191, %v173
  %197 = vst.msk [vmem:[#allocation2 + $0x28] sm:$0xff] %vm191, %v178
  %198 = vst.msk [vmem:[#allocation2 + $0x30] sm:$0xff] %vm191, %v183
  %199 = vst.msk [vmem:[#allocation2 + $0x38] sm:$0xff] %vm191, %v188
  %v200 = vld [vmem:[%s4] sm:$0xff]
  %v201 = vld [vmem:[%s4 + $0x8] sm:$0xff]
  %v202 = vld [vmem:[%s4 + $0x10] sm:$0xff]
  %v203 = vld [vmem:[%s4 + $0x18] sm:$0xff]
  %v204 = vld [vmem:[%s6] sm:$0x1]
  %v206 = vlaneseq
  %v207 = vshrl.u32 %v206, 7
  %v208 = vsub.s32 0, %v207
  %v209 = vrot.slane %v204, %v208
  %vm211 = vcmask 261120
  %v213 = vsel %vm211, 0.0, 0
  %215 = vmatprep.subr.mxu0 0.0
  %216 = vmatpush1.msra.mxu0 %v200
  %217 = vmatprep.subr.mxu0 0.0
  %218 = vmatpush1.msra.mxu0 %v201
  %219 = vmatprep.subr.mxu0 0.0
  %220 = vmatpush1.msra.mxu0 %v202
  %221 = vmatprep.subr.mxu0 0.0
  %222 = vmatpush1.msra.mxu0 %v203
  %223 = vmatprep.subr.mxu0 0.0
  %224 = vmatpush1.msra.mxu0 0.0
  %225 = vmatprep.subr.mxu0 0.0
  %226 = vmatpush1.msra.mxu0 0.0
  %227 = vmatprep.subr.mxu0 0.0
  %228 = vmatpush1.msra.mxu0 0.0
  %229 = vmatprep.subr.mxu0 0.0
  %230 = vmatpush1.msra.mxu0 0.0
  %231 = vmatprep.subr.mxu0 0.0
  %232 = vmatpush1.msra.mxu0 0.0
  %233 = vmatprep.subr.mxu0 0.0
  %234 = vmatpush1.msra.mxu0 0.0
  %235 = vmatprep.subr.mxu0 0.0
  %236 = vmatpush1.msra.mxu0 0.0
  %237 = vmatprep.subr.mxu0 0.0
  %238 = vmatpush1.msra.mxu0 0.0
  %239 = vmatprep.subr.mxu0 0.0
  %240 = vmatpush1.msra.mxu0 0.0
  %241 = vmatprep.subr.mxu0 0.0
  %242 = vmatpush1.msra.mxu0 0.0
  %243 = vmatprep.subr.mxu0 0.0
  %244 = vmatpush1.msra.mxu0 0.0
  %245 = vmatprep.subr.mxu0 0.0
  %246 = vmatpush1.msra.mxu0 0.0
  %247 = vmatprep.subr.mxu0 0.0
  %248 = vmatpush1.msra.mxu0 0.0
  %249 = vmatprep.subr.mxu0 0.0
  %250 = vmatpush1.msra.mxu0 0.0
  %251 = vmatprep.subr.mxu0 0.0
  %252 = vmatpush1.msra.mxu0 0.0
  %253 = vmatprep.subr.mxu0 0.0
  %254 = vmatpush1.msra.mxu0 0.0
  %255 = vmatprep.subr.mxu0 0.0
  %256 = vmatpush1.msra.mxu0 0.0
  %257 = vmatprep.subr.mxu0 0.0
  %258 = vmatpush1.msra.mxu0 0.0
  %259 = vmatprep.subr.mxu0 0.0
  %260 = vmatpush1.msra.mxu0 0.0
  %261 = vmatprep.subr.mxu0 0.0
  %262 = vmatpush1.msra.mxu0 0.0
  %263 = vmatprep.subr.mxu0 0.0
  %264 = vmatpush1.msra.mxu0 0.0
  %265 = vmatprep.subr.mxu0 0.0
  %266 = vmatpush1.msra.mxu0 0.0
  %267 = vmatprep.subr.mxu0 0.0
  %268 = vmatpush1.msra.mxu0 0.0
  %269 = vmatprep.subr.mxu0 0.0
  %270 = vmatpush1.msra.mxu0 0.0
  %271 = vmatprep.subr.mxu0 0.0
  %272 = vmatpush1.msra.mxu0 0.0
  %273 = vmatprep.subr.mxu0 0.0
  %274 = vmatpush1.msra.mxu0 0.0
  %275 = vmatprep.subr.mxu0 0.0
  %276 = vmatpush1.msra.mxu0 0.0
  %277 = vmatprep.subr.mxu0 0.0
  %278 = vmatpush1.msra.mxu0 0.0
  %279 = vmatprep.mubr.f32.mxu0 0.0
  %280 = vmatmul.mubr.f32.gmra.mrb[0].mxu0 %v213
  %v281 = vpop.f32.mrb[0].mxu0
  %v282 = vadd.f32 %v209, %v281
  %v283 = vpop.f32.mrb[0].mxu0
  %284 = vdwg.mxu0
  %v285 = vld [vmem:[#allocation2] sm:$0xff]
  %v286 = vadd.f32 %v285, %v282
  %v287 = vxor.u32 %v286, 2147483648
  %v288 = vmul.f32 %v287, 1.442695
  %v289 = vpow.pop %v288
  %v290 = vadd.f32 %v289, 1.0
  %v291 = vrcp.pop %v290
  %v292 = vmul.f32 1.0, %v291
  %294 = vrot.lane.b32.xlu0 %v282, 64
  %v295 = vpop.permute.xlu0 %294
  %v297 = vmul.f32 %v292, %v295
  %299 = vrot.lane.b32.xlu0 %v297, 64
  %v300 = vpop.permute.xlu0 %299
  %v302 = vadd.f32 %v285, %v300
  %v303 = vtanh.pop %v302
  %v304 = vsub.f32 1.0, %v292
  %306 = vrot.lane.b32.xlu0 %v303, 96
  %v307 = vpop.permute.xlu0 %306
  %v309 = vmul.f32 %v304, %v307
  %v310 = vmul.f32 %v292, 0.0
  %v311 = vadd.f32 %v309, %v310
  %v312 = vld [vmem:[%s1] sm:$0xff]
  %314 = vset.pattern.permute.xlu0 0
  %315 = vperm.xlu0 %314, %v312
  %v316 = vpop.permute.xlu0 %315
  %v318 = vmul.f32 %v316, %v311
  %320 = vrot.lane.b32.xlu0 %v318, 96
  %v321 = vpop.permute.xlu0 %320
  %323 = vst.msk [vmem:[#allocation3] sm:$0xff] %vm211, %v321
  %v324 = vsub.f32 1.0, %v312
  %326 = vset.pattern.permute.xlu0 0
  %327 = vperm.xlu0 %326, %v324
  %v328 = vpop.permute.xlu0 %327
  %v330 = vmul.f32 %v328, 0.0
  %v331 = vadd.f32 %v318, %v330
  %333 = vrot.lane.b32.xlu0 %v331, 96
  %v334 = vpop.permute.xlu0 %333
  %v335 = vsel %vm211, %v334, 0
  %337 = vmatprep.subr.mxu0 0.0
  %338 = vmatpush1.msra.mxu0 %v200
  %339 = vmatprep.subr.mxu0 0.0
  %340 = vmatpush1.msra.mxu0 %v201
  %341 = vmatprep.subr.mxu0 0.0
  %342 = vmatpush1.msra.mxu0 %v202
  %343 = vmatprep.subr.mxu0 0.0
  %344 = vmatpush1.msra.mxu0 %v203
  %345 = vmatprep.subr.mxu0 0.0
  %346 = vmatpush1.msra.mxu0 0.0
  %347 = vmatprep.subr.mxu0 0.0
  %348 = vmatpush1.msra.mxu0 0.0
  %349 = vmatprep.subr.mxu0 0.0
  %350 = vmatpush1.msra.mxu0 0.0
  %351 = vmatprep.subr.mxu0 0.0
  %352 = vmatpush1.msra.mxu0 0.0
  %353 = vmatprep.subr.mxu0 0.0
  %354 = vmatpush1.msra.mxu0 0.0
  %355 = vmatprep.subr.mxu0 0.0
  %356 = vmatpush1.msra.mxu0 0.0
  %357 = vmatprep.subr.mxu0 0.0
  %358 = vmatpush1.msra.mxu0 0.0
  %359 = vmatprep.subr.mxu0 0.0
  %360 = vmatpush1.msra.mxu0 0.0
  %361 = vmatprep.subr.mxu0 0.0
  %362 = vmatpush1.msra.mxu0 0.0
  %363 = vmatprep.subr.mxu0 0.0
  %364 = vmatpush1.msra.mxu0 0.0
  %365 = vmatprep.subr.mxu0 0.0
  %366 = vmatpush1.msra.mxu0 0.0
  %367 = vmatprep.subr.mxu0 0.0
  %368 = vmatpush1.msra.mxu0 0.0
  %369 = vmatprep.subr.mxu0 0.0
  %370 = vmatpush1.msra.mxu0 0.0
  %371 = vmatprep.subr.mxu0 0.0
  %372 = vmatpush1.msra.mxu0 0.0
  %373 = vmatprep.subr.mxu0 0.0
  %374 = vmatpush1.msra.mxu0 0.0
  %375 = vmatprep.subr.mxu0 0.0
  %376 = vmatpush1.msra.mxu0 0.0
  %377 = vmatprep.subr.mxu0 0.0
  %378 = vmatpush1.msra.mxu0 0.0
  %379 = vmatprep.subr.mxu0 0.0
  %380 = vmatpush1.msra.mxu0 0.0
  %381 = vmatprep.subr.mxu0 0.0
  %382 = vmatpush1.msra.mxu0 0.0
  %383 = vmatprep.subr.mxu0 0.0
  %384 = vmatpush1.msra.mxu0 0.0
  %385 = vmatprep.subr.mxu0 0.0
  %386 = vmatpush1.msra.mxu0 0.0
  %387 = vmatprep.subr.mxu0 0.0
  %388 = vmatpush1.msra.mxu0 0.0
  %389 = vmatprep.subr.mxu0 0.0
  %390 = vmatpush1.msra.mxu0 0.0
  %391 = vmatprep.subr.mxu0 0.0
  %392 = vmatpush1.msra.mxu0 0.0
  %393 = vmatprep.subr.mxu0 0.0
  %394 = vmatpush1.msra.mxu0 0.0
  %395 = vmatprep.subr.mxu0 0.0
  %396 = vmatpush1.msra.mxu0 0.0
  %397 = vmatprep.subr.mxu0 0.0
  %398 = vmatpush1.msra.mxu0 0.0
  %399 = vmatprep.subr.mxu0 0.0
  %400 = vmatpush1.msra.mxu0 0.0
  %401 = vmatprep.mubr.f32.mxu0 0.0
  %402 = vmatmul.mubr.f32.gmra.mrb[0].mxu0 %v335
  %v403 = vpop.f32.mrb[0].mxu0
  %v404 = vadd.f32 %v209, %v403
  %v405 = vpop.f32.mrb[0].mxu0
  %406 = vdwg.mxu0
  %s407 = scalar_lea.vmem [#allocation2], 8
  %v408 = vld [vmem:[%s407] sm:$0xff]
  %v409 = vadd.f32 %v408, %v404
  %v410 = vxor.u32 %v409, 2147483648
  %v411 = vmul.f32 %v410, 1.442695
  %v412 = vpow.pop %v411
  %v413 = vadd.f32 %v412, 1.0
  %v414 = vrcp.pop %v413
  %v415 = vmul.f32 1.0, %v414
  %417 = vrot.lane.b32.xlu0 %v404, 64
  %v418 = vpop.permute.xlu0 %417
  %v420 = vmul.f32 %v415, %v418
  %422 = vrot.lane.b32.xlu0 %v420, 64
  %v423 = vpop.permute.xlu0 %422
  %v425 = vadd.f32 %v408, %v423
  %v426 = vtanh.pop %v425
  %v427 = vsub.f32 1.0, %v415
  %429 = vrot.lane.b32.xlu0 %v426, 96
  %v430 = vpop.permute.xlu0 %429
  %v432 = vmul.f32 %v427, %v430
  %v433 = vmul.f32 %v415, %v331
  %v434 = vadd.f32 %v432, %v433
  %s435 = scalar_lea.vmem %s1, 8
  %v436 = vld [vmem:[%s435] sm:$0xff]
  %438 = vset.pattern.permute.xlu0 0
  %439 = vperm.xlu0 %438, %v436
  %v440 = vpop.permute.xlu0 %439
  %v442 = vmul.f32 %v440, %v434
  %444 = vrot.lane.b32.xlu0 %v442, 96
  %v445 = vpop.permute.xlu0 %444
  %s447 = scalar_lea.vmem [#allocation3], 8
  %448 = vst.msk [vmem:[%s447] sm:$0xff] %vm211, %v445
  %v449 = vsub.f32 1.0, %v436
  %451 = vset.pattern.permute.xlu0 0
  %452 = vperm.xlu0 %451, %v449
  %v453 = vpop.permute.xlu0 %452
  %v455 = vmul.f32 %v453, %v331
  %v456 = vadd.f32 %v442, %v455
  %458 = vrot.lane.b32.xlu0 %v456, 96
  %v459 = vpop.permute.xlu0 %458
  %v460 = vsel %vm211, %v459, 0
  %462 = vmatprep.subr.mxu0 0.0
  %463 = vmatpush1.msra.mxu0 %v200
  %464 = vmatprep.subr.mxu0 0.0
  %465 = vmatpush1.msra.mxu0 %v201
  %466 = vmatprep.subr.mxu0 0.0
  %467 = vmatpush1.msra.mxu0 %v202
  %468 = vmatprep.subr.mxu0 0.0
  %469 = vmatpush1.msra.mxu0 %v203
  %470 = vmatprep.subr.mxu0 0.0
  %471 = vmatpush1.msra.mxu0 0.0
  %472 = vmatprep.subr.mxu0 0.0
  %473 = vmatpush1.msra.mxu0 0.0
  %474 = vmatprep.subr.mxu0 0.0
  %475 = vmatpush1.msra.mxu0 0.0
  %476 = vmatprep.subr.mxu0 0.0
  %477 = vmatpush1.msra.mxu0 0.0
  %478 = vmatprep.subr.mxu0 0.0
  %479 = vmatpush1.msra.mxu0 0.0
  %480 = vmatprep.subr.mxu0 0.0
  %481 = vmatpush1.msra.mxu0 0.0
  %482 = vmatprep.subr.mxu0 0.0
  %483 = vmatpush1.msra.mxu0 0.0
  %484 = vmatprep.subr.mxu0 0.0
  %485 = vmatpush1.msra.mxu0 0.0
  %486 = vmatprep.subr.mxu0 0.0
  %487 = vmatpush1.msra.mxu0 0.0
  %488 = vmatprep.subr.mxu0 0.0
  %489 = vmatpush1.msra.mxu0 0.0
  %490 = vmatprep.subr.mxu0 0.0
  %491 = vmatpush1.msra.mxu0 0.0
  %492 = vmatprep.subr.mxu0 0.0
  %493 = vmatpush1.msra.mxu0 0.0
  %494 = vmatprep.subr.mxu0 0.0
  %495 = vmatpush1.msra.mxu0 0.0
  %496 = vmatprep.subr.mxu0 0.0
  %497 = vmatpush1.msra.mxu0 0.0
  %498 = vmatprep.subr.mxu0 0.0
  %499 = vmatpush1.msra.mxu0 0.0
  %500 = vmatprep.subr.mxu0 0.0
  %501 = vmatpush1.msra.mxu0 0.0
  %502 = vmatprep.subr.mxu0 0.0
  %503 = vmatpush1.msra.mxu0 0.0
  %504 = vmatprep.subr.mxu0 0.0
  %505 = vmatpush1.msra.mxu0 0.0
  %506 = vmatprep.subr.mxu0 0.0
  %507 = vmatpush1.msra.mxu0 0.0
  %508 = vmatprep.subr.mxu0 0.0
  %509 = vmatpush1.msra.mxu0 0.0
  %510 = vmatprep.subr.mxu0 0.0
  %511 = vmatpush1.msra.mxu0 0.0
  %512 = vmatprep.subr.mxu0 0.0
  %513 = vmatpush1.msra.mxu0 0.0
  %514 = vmatprep.subr.mxu0 0.0
  %515 = vmatpush1.msra.mxu0 0.0
  %516 = vmatprep.subr.mxu0 0.0
  %517 = vmatpush1.msra.mxu0 0.0
  %518 = vmatprep.subr.mxu0 0.0
  %519 = vmatpush1.msra.mxu0 0.0
  %520 = vmatprep.subr.mxu0 0.0
  %521 = vmatpush1.msra.mxu0 0.0
  %522 = vmatprep.subr.mxu0 0.0
  %523 = vmatpush1.msra.mxu0 0.0
  %524 = vmatprep.subr.mxu0 0.0
  %525 = vmatpush1.msra.mxu0 0.0
  %526 = vmatprep.mubr.f32.mxu0 0.0
  %527 = vmatmul.mubr.f32.gmra.mrb[0].mxu0 %v460
  %v528 = vpop.f32.mrb[0].mxu0
  %v529 = vadd.f32 %v209, %v528
  %v530 = vpop.f32.mrb[0].mxu0
  %531 = vdwg.mxu0
  %s532 = scalar_lea.vmem [#allocation2], 16
  %v533 = vld [vmem:[%s532] sm:$0xff]
  %v534 = vadd.f32 %v533, %v529
  %v535 = vxor.u32 %v534, 2147483648
  %v536 = vmul.f32 %v535, 1.442695
  %v537 = vpow.pop %v536
  %v538 = vadd.f32 %v537, 1.0
  %v539 = vrcp.pop %v538
  %v540 = vmul.f32 1.0, %v539
  %542 = vrot.lane.b32.xlu0 %v529, 64
  %v543 = vpop.permute.xlu0 %542
  %v545 = vmul.f32 %v540, %v543
  %547 = vrot.lane.b32.xlu0 %v545, 64
  %v548 = vpop.permute.xlu0 %547
  %v550 = vadd.f32 %v533, %v548
  %v551 = vtanh.pop %v550
  %v552 = vsub.f32 1.0, %v540
  %554 = vrot.lane.b32.xlu0 %v551, 96
  %v555 = vpop.permute.xlu0 %554
  %v557 = vmul.f32 %v552, %v555
  %v558 = vmul.f32 %v540, %v456
  %v559 = vadd.f32 %v557, %v558
  %s560 = scalar_lea.vmem %s1, 16
  %v561 = vld [vmem:[%s560] sm:$0xff]
  %563 = vset.pattern.permute.xlu0 0
  %564 = vperm.xlu0 %563, %v561
  %v565 = vpop.permute.xlu0 %564
  %v567 = vmul.f32 %v565, %v559
  %569 = vrot.lane.b32.xlu0 %v567, 96
  %v570 = vpop.permute.xlu0 %569
  %s572 = scalar_lea.vmem [#allocation3], 16
  %573 = vst.msk [vmem:[%s572] sm:$0xff] %vm211, %v570
  %v574 = vsub.f32 1.0, %v561
  %576 = vset.pattern.permute.xlu0 0
  %577 = vperm.xlu0 %576, %v574
  %v578 = vpop.permute.xlu0 %577
  %v580 = vmul.f32 %v578, %v456
  %v581 = vadd.f32 %v567, %v580
  %583 = vrot.lane.b32.xlu0 %v581, 96
  %v584 = vpop.permute.xlu0 %583
  %v585 = vsel %vm211, %v584, 0
  %587 = vmatprep.subr.mxu0 0.0
  %588 = vmatpush1.msra.mxu0 %v200
  %589 = vmatprep.subr.mxu0 0.0
  %590 = vmatpush1.msra.mxu0 %v201
  %591 = vmatprep.subr.mxu0 0.0
  %592 = vmatpush1.msra.mxu0 %v202
  %593 = vmatprep.subr.mxu0 0.0
  %594 = vmatpush1.msra.mxu0 %v203
  %595 = vmatprep.subr.mxu0 0.0
  %596 = vmatpush1.msra.mxu0 0.0
  %597 = vmatprep.subr.mxu0 0.0
  %598 = vmatpush1.msra.mxu0 0.0
  %599 = vmatprep.subr.mxu0 0.0
  %600 = vmatpush1.msra.mxu0 0.0
  %601 = vmatprep.subr.mxu0 0.0
  %602 = vmatpush1.msra.mxu0 0.0
  %603 = vmatprep.subr.mxu0 0.0
  %604 = vmatpush1.msra.mxu0 0.0
  %605 = vmatprep.subr.mxu0 0.0
  %606 = vmatpush1.msra.mxu0 0.0
  %607 = vmatprep.subr.mxu0 0.0
  %608 = vmatpush1.msra.mxu0 0.0
  %609 = vmatprep.subr.mxu0 0.0
  %610 = vmatpush1.msra.mxu0 0.0
  %611 = vmatprep.subr.mxu0 0.0
  %612 = vmatpush1.msra.mxu0 0.0
  %613 = vmatprep.subr.mxu0 0.0
  %614 = vmatpush1.msra.mxu0 0.0
  %615 = vmatprep.subr.mxu0 0.0
  %616 = vmatpush1.msra.mxu0 0.0
  %617 = vmatprep.subr.mxu0 0.0
  %618 = vmatpush1.msra.mxu0 0.0
  %619 = vmatprep.subr.mxu0 0.0
  %620 = vmatpush1.msra.mxu0 0.0
  %621 = vmatprep.subr.mxu0 0.0
  %622 = vmatpush1.msra.mxu0 0.0
  %623 = vmatprep.subr.mxu0 0.0
  %624 = vmatpush1.msra.mxu0 0.0
  %625 = vmatprep.subr.mxu0 0.0
  %626 = vmatpush1.msra.mxu0 0.0
  %627 = vmatprep.subr.mxu0 0.0
  %628 = vmatpush1.msra.mxu0 0.0
  %629 = vmatprep.subr.mxu0 0.0
  %630 = vmatpush1.msra.mxu0 0.0
  %631 = vmatprep.subr.mxu0 0.0
  %632 = vmatpush1.msra.mxu0 0.0
  %633 = vmatprep.subr.mxu0 0.0
  %634 = vmatpush1.msra.mxu0 0.0
  %635 = vmatprep.subr.mxu0 0.0
  %636 = vmatpush1.msra.mxu0 0.0
  %637 = vmatprep.subr.mxu0 0.0
  %638 = vmatpush1.msra.mxu0 0.0
  %639 = vmatprep.subr.mxu0 0.0
  %640 = vmatpush1.msra.mxu0 0.0
  %641 = vmatprep.subr.mxu0 0.0
  %642 = vmatpush1.msra.mxu0 0.0
  %643 = vmatprep.subr.mxu0 0.0
  %644 = vmatpush1.msra.mxu0 0.0
  %645 = vmatprep.subr.mxu0 0.0
  %646 = vmatpush1.msra.mxu0 0.0
  %647 = vmatprep.subr.mxu0 0.0
  %648 = vmatpush1.msra.mxu0 0.0
  %649 = vmatprep.subr.mxu0 0.0
  %650 = vmatpush1.msra.mxu0 0.0
  %651 = vmatprep.mubr.f32.mxu0 0.0
  %652 = vmatmul.mubr.f32.gmra.mrb[0].mxu0 %v585
  %v653 = vpop.f32.mrb[0].mxu0
  %v654 = vadd.f32 %v209, %v653
  %v655 = vpop.f32.mrb[0].mxu0
  %656 = vdwg.mxu0
  %s657 = scalar_lea.vmem [#allocation2], 24
  %v658 = vld [vmem:[%s657] sm:$0xff]
  %v659 = vadd.f32 %v658, %v654
  %v660 = vxor.u32 %v659, 2147483648
  %v661 = vmul.f32 %v660, 1.442695
  %v662 = vpow.pop %v661
  %v663 = vadd.f32 %v662, 1.0
  %v664 = vrcp.pop %v663
  %v665 = vmul.f32 1.0, %v664
  %667 = vrot.lane.b32.xlu0 %v654, 64
  %v668 = vpop.permute.xlu0 %667
  %v670 = vmul.f32 %v665, %v668
  %672 = vrot.lane.b32.xlu0 %v670, 64
  %v673 = vpop.permute.xlu0 %672
  %v675 = vadd.f32 %v658, %v673
  %v676 = vtanh.pop %v675
  %v677 = vsub.f32 1.0, %v665
  %679 = vrot.lane.b32.xlu0 %v676, 96
  %v680 = vpop.permute.xlu0 %679
  %v682 = vmul.f32 %v677, %v680
  %v683 = vmul.f32 %v665, %v581
  %v684 = vadd.f32 %v682, %v683
  %s685 = scalar_lea.vmem %s1, 24
  %v686 = vld [vmem:[%s685] sm:$0xff]
  %688 = vset.pattern.permute.xlu0 0
  %689 = vperm.xlu0 %688, %v686
  %v690 = vpop.permute.xlu0 %689
  %v692 = vmul.f32 %v690, %v684
  %694 = vrot.lane.b32.xlu0 %v692, 96
  %v695 = vpop.permute.xlu0 %694
  %s697 = scalar_lea.vmem [#allocation3], 24
  %698 = vst.msk [vmem:[%s697] sm:$0xff] %vm211, %v695
  %v699 = vsub.f32 1.0, %v686
  %701 = vset.pattern.permute.xlu0 0
  %702 = vperm.xlu0 %701, %v699
  %v703 = vpop.permute.xlu0 %702
  %v705 = vmul.f32 %v703, %v581
  %v706 = vadd.f32 %v692, %v705
  %708 = vrot.lane.b32.xlu0 %v706, 96
  %v709 = vpop.permute.xlu0 %708
  %v710 = vsel %vm211, %v709, 0
  %712 = vmatprep.subr.mxu0 0.0
  %713 = vmatpush1.msra.mxu0 %v200
  %714 = vmatprep.subr.mxu0 0.0
  %715 = vmatpush1.msra.mxu0 %v201
  %716 = vmatprep.subr.mxu0 0.0
  %717 = vmatpush1.msra.mxu0 %v202
  %718 = vmatprep.subr.mxu0 0.0
  %719 = vmatpush1.msra.mxu0 %v203
  %720 = vmatprep.subr.mxu0 0.0
  %721 = vmatpush1.msra.mxu0 0.0
  %722 = vmatprep.subr.mxu0 0.0
  %723 = vmatpush1.msra.mxu0 0.0
  %724 = vmatprep.subr.mxu0 0.0
  %725 = vmatpush1.msra.mxu0 0.0
  %726 = vmatprep.subr.mxu0 0.0
  %727 = vmatpush1.msra.mxu0 0.0
  %728 = vmatprep.subr.mxu0 0.0
  %729 = vmatpush1.msra.mxu0 0.0
  %730 = vmatprep.subr.mxu0 0.0
  %731 = vmatpush1.msra.mxu0 0.0
  %732 = vmatprep.subr.mxu0 0.0
  %733 = vmatpush1.msra.mxu0 0.0
  %734 = vmatprep.subr.mxu0 0.0
  %735 = vmatpush1.msra.mxu0 0.0
  %736 = vmatprep.subr.mxu0 0.0
  %737 = vmatpush1.msra.mxu0 0.0
  %738 = vmatprep.subr.mxu0 0.0
  %739 = vmatpush1.msra.mxu0 0.0
  %740 = vmatprep.subr.mxu0 0.0
  %741 = vmatpush1.msra.mxu0 0.0
  %742 = vmatprep.subr.mxu0 0.0
  %743 = vmatpush1.msra.mxu0 0.0
  %744 = vmatprep.subr.mxu0 0.0
  %745 = vmatpush1.msra.mxu0 0.0
  %746 = vmatprep.subr.mxu0 0.0
  %747 = vmatpush1.msra.mxu0 0.0
  %748 = vmatprep.subr.mxu0 0.0
  %749 = vmatpush1.msra.mxu0 0.0
  %750 = vmatprep.subr.mxu0 0.0
  %751 = vmatpush1.msra.mxu0 0.0
  %752 = vmatprep.subr.mxu0 0.0
  %753 = vmatpush1.msra.mxu0 0.0
  %754 = vmatprep.subr.mxu0 0.0
  %755 = vmatpush1.msra.mxu0 0.0
  %756 = vmatprep.subr.mxu0 0.0
  %757 = vmatpush1.msra.mxu0 0.0
  %758 = vmatprep.subr.mxu0 0.0
  %759 = vmatpush1.msra.mxu0 0.0
  %760 = vmatprep.subr.mxu0 0.0
  %761 = vmatpush1.msra.mxu0 0.0
  %762 = vmatprep.subr.mxu0 0.0
  %763 = vmatpush1.msra.mxu0 0.0
  %764 = vmatprep.subr.mxu0 0.0
  %765 = vmatpush1.msra.mxu0 0.0
  %766 = vmatprep.subr.mxu0 0.0
  %767 = vmatpush1.msra.mxu0 0.0
  %768 = vmatprep.subr.mxu0 0.0
  %769 = vmatpush1.msra.mxu0 0.0
  %770 = vmatprep.subr.mxu0 0.0
  %771 = vmatpush1.msra.mxu0 0.0
  %772 = vmatprep.subr.mxu0 0.0
  %773 = vmatpush1.msra.mxu0 0.0
  %774 = vmatprep.subr.mxu0 0.0
  %775 = vmatpush1.msra.mxu0 0.0
  %776 = vmatprep.mubr.f32.mxu0 0.0
  %777 = vmatmul.mubr.f32.gmra.mrb[0].mxu0 %v710
  %v778 = vpop.f32.mrb[0].mxu0
  %v779 = vadd.f32 %v209, %v778
  %v780 = vpop.f32.mrb[0].mxu0
  %781 = vdwg.mxu0
  %s782 = scalar_lea.vmem [#allocation2], 32
  %v783 = vld [vmem:[%s782] sm:$0xff]
  %v784 = vadd.f32 %v783, %v779
  %v785 = vxor.u32 %v784, 2147483648
  %v786 = vmul.f32 %v785, 1.442695
  %v787 = vpow.pop %v786
  %v788 = vadd.f32 %v787, 1.0
  %v789 = vrcp.pop %v788
  %v790 = vmul.f32 1.0, %v789
  %792 = vrot.lane.b32.xlu0 %v779, 64
  %v793 = vpop.permute.xlu0 %792
  %v795 = vmul.f32 %v790, %v793
  %797 = vrot.lane.b32.xlu0 %v795, 64
  %v798 = vpop.permute.xlu0 %797
  %v800 = vadd.f32 %v783, %v798
  %v801 = vtanh.pop %v800
  %v802 = vsub.f32 1.0, %v790
  %804 = vrot.lane.b32.xlu0 %v801, 96
  %v805 = vpop.permute.xlu0 %804
  %v807 = vmul.f32 %v802, %v805
  %v808 = vmul.f32 %v790, %v706
  %v809 = vadd.f32 %v807, %v808
  %s810 = scalar_lea.vmem %s1, 32
  %v811 = vld [vmem:[%s810] sm:$0xff]
  %813 = vset.pattern.permute.xlu0 0
  %814 = vperm.xlu0 %813, %v811
  %v815 = vpop.permute.xlu0 %814
  %v817 = vmul.f32 %v815, %v809
  %819 = vrot.lane.b32.xlu0 %v817, 96
  %v820 = vpop.permute.xlu0 %819
  %s822 = scalar_lea.vmem [#allocation3], 32
  %823 = vst.msk [vmem:[%s822] sm:$0xff] %vm211, %v820
  %v824 = vsub.f32 1.0, %v811
  %826 = vset.pattern.permute.xlu0 0
  %827 = vperm.xlu0 %826, %v824
  %v828 = vpop.permute.xlu0 %827
  %v830 = vmul.f32 %v828, %v706
  %v831 = vadd.f32 %v817, %v830
  %833 = vrot.lane.b32.xlu0 %v831, 96
  %v834 = vpop.permute.xlu0 %833
  %v835 = vsel %vm211, %v834, 0
  %837 = vmatprep.subr.mxu0 0.0
  %838 = vmatpush1.msra.mxu0 %v200
  %839 = vmatprep.subr.mxu0 0.0
  %840 = vmatpush1.msra.mxu0 %v201
  %841 = vmatprep.subr.mxu0 0.0
  %842 = vmatpush1.msra.mxu0 %v202
  %843 = vmatprep.subr.mxu0 0.0
  %844 = vmatpush1.msra.mxu0 %v203
  %845 = vmatprep.subr.mxu0 0.0
  %846 = vmatpush1.msra.mxu0 0.0
  %847 = vmatprep.subr.mxu0 0.0
  %848 = vmatpush1.msra.mxu0 0.0
  %849 = vmatprep.subr.mxu0 0.0
  %850 = vmatpush1.msra.mxu0 0.0
  %851 = vmatprep.subr.mxu0 0.0
  %852 = vmatpush1.msra.mxu0 0.0
  %853 = vmatprep.subr.mxu0 0.0
  %854 = vmatpush1.msra.mxu0 0.0
  %855 = vmatprep.subr.mxu0 0.0
  %856 = vmatpush1.msra.mxu0 0.0
  %857 = vmatprep.subr.mxu0 0.0
  %858 = vmatpush1.msra.mxu0 0.0
  %859 = vmatprep.subr.mxu0 0.0
  %860 = vmatpush1.msra.mxu0 0.0
  %861 = vmatprep.subr.mxu0 0.0
  %862 = vmatpush1.msra.mxu0 0.0
  %863 = vmatprep.subr.mxu0 0.0
  %864 = vmatpush1.msra.mxu0 0.0
  %865 = vmatprep.subr.mxu0 0.0
  %866 = vmatpush1.msra.mxu0 0.0
  %867 = vmatprep.subr.mxu0 0.0
  %868 = vmatpush1.msra.mxu0 0.0
  %869 = vmatprep.subr.mxu0 0.0
  %870 = vmatpush1.msra.mxu0 0.0
  %871 = vmatprep.subr.mxu0 0.0
  %872 = vmatpush1.msra.mxu0 0.0
  %873 = vmatprep.subr.mxu0 0.0
  %874 = vmatpush1.msra.mxu0 0.0
  %875 = vmatprep.subr.mxu0 0.0
  %876 = vmatpush1.msra.mxu0 0.0
  %877 = vmatprep.subr.mxu0 0.0
  %878 = vmatpush1.msra.mxu0 0.0
  %879 = vmatprep.subr.mxu0 0.0
  %880 = vmatpush1.msra.mxu0 0.0
  %881 = vmatprep.subr.mxu0 0.0
  %882 = vmatpush1.msra.mxu0 0.0
  %883 = vmatprep.subr.mxu0 0.0
  %884 = vmatpush1.msra.mxu0 0.0
  %885 = vmatprep.subr.mxu0 0.0
  %886 = vmatpush1.msra.mxu0 0.0
  %887 = vmatprep.subr.mxu0 0.0
  %888 = vmatpush1.msra.mxu0 0.0
  %889 = vmatprep.subr.mxu0 0.0
  %890 = vmatpush1.msra.mxu0 0.0
  %891 = vmatprep.subr.mxu0 0.0
  %892 = vmatpush1.msra.mxu0 0.0
  %893 = vmatprep.subr.mxu0 0.0
  %894 = vmatpush1.msra.mxu0 0.0
  %895 = vmatprep.subr.mxu0 0.0
  %896 = vmatpush1.msra.mxu0 0.0
  %897 = vmatprep.subr.mxu0 0.0
  %898 = vmatpush1.msra.mxu0 0.0
  %899 = vmatprep.subr.mxu0 0.0
  %900 = vmatpush1.msra.mxu0 0.0
  %901 = vmatprep.mubr.f32.mxu0 0.0
  %902 = vmatmul.mubr.f32.gmra.mrb[0].mxu0 %v835
  %v903 = vpop.f32.mrb[0].mxu0
  %v904 = vadd.f32 %v209, %v903
  %v905 = vpop.f32.mrb[0].mxu0
  %906 = vdwg.mxu0
  %s907 = scalar_lea.vmem [#allocation2], 40
  %v908 = vld [vmem:[%s907] sm:$0xff]
  %v909 = vadd.f32 %v908, %v904
  %v910 = vxor.u32 %v909, 2147483648
  %v911 = vmul.f32 %v910, 1.442695
  %v912 = vpow.pop %v911
  %v913 = vadd.f32 %v912, 1.0
  %v914 = vrcp.pop %v913
  %v915 = vmul.f32 1.0, %v914
  %917 = vrot.lane.b32.xlu0 %v904, 64
  %v918 = vpop.permute.xlu0 %917
  %v920 = vmul.f32 %v915, %v918
  %922 = vrot.lane.b32.xlu0 %v920, 64
  %v923 = vpop.permute.xlu0 %922
  %v925 = vadd.f32 %v908, %v923
  %v926 = vtanh.pop %v925
  %v927 = vsub.f32 1.0, %v915
  %929 = vrot.lane.b32.xlu0 %v926, 96
  %v930 = vpop.permute.xlu0 %929
  %v932 = vmul.f32 %v927, %v930
  %v933 = vmul.f32 %v915, %v831
  %v934 = vadd.f32 %v932, %v933
  %s935 = scalar_lea.vmem %s1, 40
  %v936 = vld [vmem:[%s935] sm:$0xff]
  %938 = vset.pattern.permute.xlu0 0
  %939 = vperm.xlu0 %938, %v936
  %v940 = vpop.permute.xlu0 %939
  %v942 = vmul.f32 %v940, %v934
  %944 = vrot.lane.b32.xlu0 %v942, 96
  %v945 = vpop.permute.xlu0 %944
  %s947 = scalar_lea.vmem [#allocation3], 40
  %948 = vst.msk [vmem:[%s947] sm:$0xff] %vm211, %v945
  %v949 = vsub.f32 1.0, %v936
  %951 = vset.pattern.permute.xlu0 0
  %952 = vperm.xlu0 %951, %v949
  %v953 = vpop.permute.xlu0 %952
  %v955 = vmul.f32 %v953, %v831
  %v956 = vadd.f32 %v942, %v955
  %958 = vrot.lane.b32.xlu0 %v956, 96
  %v959 = vpop.permute.xlu0 %958
  %v960 = vsel %vm211, %v959, 0
  %962 = vmatprep.subr.mxu0 0.0
  %963 = vmatpush1.msra.mxu0 %v200
  %964 = vmatprep.subr.mxu0 0.0
  %965 = vmatpush1.msra.mxu0 %v201
  %966 = vmatprep.subr.mxu0 0.0
  %967 = vmatpush1.msra.mxu0 %v202
  %968 = vmatprep.subr.mxu0 0.0
  %969 = vmatpush1.msra.mxu0 %v203
  %970 = vmatprep.subr.mxu0 0.0
  %971 = vmatpush1.msra.mxu0 0.0
  %972 = vmatprep.subr.mxu0 0.0
  %973 = vmatpush1.msra.mxu0 0.0
  %974 = vmatprep.subr.mxu0 0.0
  %975 = vmatpush1.msra.mxu0 0.0
  %976 = vmatprep.subr.mxu0 0.0
  %977 = vmatpush1.msra.mxu0 0.0
  %978 = vmatprep.subr.mxu0 0.0
  %979 = vmatpush1.msra.mxu0 0.0
  %980 = vmatprep.subr.mxu0 0.0
  %981 = vmatpush1.msra.mxu0 0.0
  %982 = vmatprep.subr.mxu0 0.0
  %983 = vmatpush1.msra.mxu0 0.0
  %984 = vmatprep.subr.mxu0 0.0
  %985 = vmatpush1.msra.mxu0 0.0
  %986 = vmatprep.subr.mxu0 0.0
  %987 = vmatpush1.msra.mxu0 0.0
  %988 = vmatprep.subr.mxu0 0.0
  %989 = vmatpush1.msra.mxu0 0.0
  %990 = vmatprep.subr.mxu0 0.0
  %991 = vmatpush1.msra.mxu0 0.0
  %992 = vmatprep.subr.mxu0 0.0
  %993 = vmatpush1.msra.mxu0 0.0
  %994 = vmatprep.subr.mxu0 0.0
  %995 = vmatpush1.msra.mxu0 0.0
  %996 = vmatprep.subr.mxu0 0.0
  %997 = vmatpush1.msra.mxu0 0.0
  %998 = vmatprep.subr.mxu0 0.0
  %999 = vmatpush1.msra.mxu0 0.0
  %1000 = vmatprep.subr.mxu0 0.0
  %1001 = vmatpush1.msra.mxu0 0.0
  %1002 = vmatprep.subr.mxu0 0.0
  %1003 = vmatpush1.msra.mxu0 0.0
  %1004 = vmatprep.subr.mxu0 0.0
  %1005 = vmatpush1.msra.mxu0 0.0
  %1006 = vmatprep.subr.mxu0 0.0
  %1007 = vmatpush1.msra.mxu0 0.0
  %1008 = vmatprep.subr.mxu0 0.0
  %1009 = vmatpush1.msra.mxu0 0.0
  %1010 = vmatprep.subr.mxu0 0.0
  %1011 = vmatpush1.msra.mxu0 0.0
  %1012 = vmatprep.subr.mxu0 0.0
  %1013 = vmatpush1.msra.mxu0 0.0
  %1014 = vmatprep.subr.mxu0 0.0
  %1015 = vmatpush1.msra.mxu0 0.0
  %1016 = vmatprep.subr.mxu0 0.0
  %1017 = vmatpush1.msra.mxu0 0.0
  %1018 = vmatprep.subr.mxu0 0.0
  %1019 = vmatpush1.msra.mxu0 0.0
  %1020 = vmatprep.subr.mxu0 0.0
  %1021 = vmatpush1.msra.mxu0 0.0
  %1022 = vmatprep.subr.mxu0 0.0
  %1023 = vmatpush1.msra.mxu0 0.0
  %1024 = vmatprep.subr.mxu0 0.0
  %1025 = vmatpush1.msra.mxu0 0.0
  %1026 = vmatprep.mubr.f32.mxu0 0.0
  %1027 = vmatmul.mubr.f32.gmra.mrb[0].mxu0 %v960
  %v1028 = vpop.f32.mrb[0].mxu0
  %v1029 = vadd.f32 %v209, %v1028
  %v1030 = vpop.f32.mrb[0].mxu0
  %1031 = vdwg.mxu0
  %s1032 = scalar_lea.vmem [#allocation2], 48
  %v1033 = vld [vmem:[%s1032] sm:$0xff]
  %v1034 = vadd.f32 %v1033, %v1029
  %v1035 = vxor.u32 %v1034, 2147483648
  %v1036 = vmul.f32 %v1035, 1.442695
  %v1037 = vpow.pop %v1036
  %v1038 = vadd.f32 %v1037, 1.0
  %v1039 = vrcp.pop %v1038
  %v1040 = vmul.f32 1.0, %v1039
  %1042 = vrot.lane.b32.xlu0 %v1029, 64
  %v1043 = vpop.permute.xlu0 %1042
  %v1045 = vmul.f32 %v1040, %v1043
  %1047 = vrot.lane.b32.xlu0 %v1045, 64
  %v1048 = vpop.permute.xlu0 %1047
  %v1050 = vadd.f32 %v1033, %v1048
  %v1051 = vtanh.pop %v1050
  %v1052 = vsub.f32 1.0, %v1040
  %1054 = vrot.lane.b32.xlu0 %v1051, 96
  %v1055 = vpop.permute.xlu0 %1054
  %v1057 = vmul.f32 %v1052, %v1055
  %v1058 = vmul.f32 %v1040, %v956
  %v1059 = vadd.f32 %v1057, %v1058
  %s1060 = scalar_lea.vmem %s1, 48
  %v1061 = vld [vmem:[%s1060] sm:$0xff]
  %1063 = vset.pattern.permute.xlu0 0
  %1064 = vperm.xlu0 %1063, %v1061
  %v1065 = vpop.permute.xlu0 %1064
  %v1067 = vmul.f32 %v1065, %v1059
  %1069 = vrot.lane.b32.xlu0 %v1067, 96
  %v1070 = vpop.permute.xlu0 %1069
  %s1072 = scalar_lea.vmem [#allocation3], 48
  %1073 = vst.msk [vmem:[%s1072] sm:$0xff] %vm211, %v1070
  %v1074 = vsub.f32 1.0, %v1061
  %1076 = vset.pattern.permute.xlu0 0
  %1077 = vperm.xlu0 %1076, %v1074
  %v1078 = vpop.permute.xlu0 %1077
  %v1080 = vmul.f32 %v1078, %v956
  %v1081 = vadd.f32 %v1067, %v1080
  %1083 = vrot.lane.b32.xlu0 %v1081, 96
  %v1084 = vpop.permute.xlu0 %1083
  %v1085 = vsel %vm211, %v1084, 0
  %1087 = vmatprep.subr.mxu0 0.0
  %1088 = vmatpush1.msra.mxu0 %v200
  %1089 = vmatprep.subr.mxu0 0.0
  %1090 = vmatpush1.msra.mxu0 %v201
  %1091 = vmatprep.subr.mxu0 0.0
  %1092 = vmatpush1.msra.mxu0 %v202
  %1093 = vmatprep.subr.mxu0 0.0
  %1094 = vmatpush1.msra.mxu0 %v203
  %1095 = vmatprep.subr.mxu0 0.0
  %1096 = vmatpush1.msra.mxu0 0.0
  %1097 = vmatprep.subr.mxu0 0.0
  %1098 = vmatpush1.msra.mxu0 0.0
  %1099 = vmatprep.subr.mxu0 0.0
  %1100 = vmatpush1.msra.mxu0 0.0
  %1101 = vmatprep.subr.mxu0 0.0
  %1102 = vmatpush1.msra.mxu0 0.0
  %1103 = vmatprep.subr.mxu0 0.0
  %1104 = vmatpush1.msra.mxu0 0.0
  %1105 = vmatprep.subr.mxu0 0.0
  %1106 = vmatpush1.msra.mxu0 0.0
  %1107 = vmatprep.subr.mxu0 0.0
  %1108 = vmatpush1.msra.mxu0 0.0
  %1109 = vmatprep.subr.mxu0 0.0
  %1110 = vmatpush1.msra.mxu0 0.0
  %1111 = vmatprep.subr.mxu0 0.0
  %1112 = vmatpush1.msra.mxu0 0.0
  %1113 = vmatprep.subr.mxu0 0.0
  %1114 = vmatpush1.msra.mxu0 0.0
  %1115 = vmatprep.subr.mxu0 0.0
  %1116 = vmatpush1.msra.mxu0 0.0
  %1117 = vmatprep.subr.mxu0 0.0
  %1118 = vmatpush1.msra.mxu0 0.0
  %1119 = vmatprep.subr.mxu0 0.0
  %1120 = vmatpush1.msra.mxu0 0.0
  %1121 = vmatprep.subr.mxu0 0.0
  %1122 = vmatpush1.msra.mxu0 0.0
  %1123 = vmatprep.subr.mxu0 0.0
  %1124 = vmatpush1.msra.mxu0 0.0
  %1125 = vmatprep.subr.mxu0 0.0
  %1126 = vmatpush1.msra.mxu0 0.0
  %1127 = vmatprep.subr.mxu0 0.0
  %1128 = vmatpush1.msra.mxu0 0.0
  %1129 = vmatprep.subr.mxu0 0.0
  %1130 = vmatpush1.msra.mxu0 0.0
  %1131 = vmatprep.subr.mxu0 0.0
  %1132 = vmatpush1.msra.mxu0 0.0
  %1133 = vmatprep.subr.mxu0 0.0
  %1134 = vmatpush1.msra.mxu0 0.0
  %1135 = vmatprep.subr.mxu0 0.0
  %1136 = vmatpush1.msra.mxu0 0.0
  %1137 = vmatprep.subr.mxu0 0.0
  %1138 = vmatpush1.msra.mxu0 0.0
  %1139 = vmatprep.subr.mxu0 0.0
  %1140 = vmatpush1.msra.mxu0 0.0
  %1141 = vmatprep.subr.mxu0 0.0
  %1142 = vmatpush1.msra.mxu0 0.0
  %1143 = vmatprep.subr.mxu0 0.0
  %1144 = vmatpush1.msra.mxu0 0.0
  %1145 = vmatprep.subr.mxu0 0.0
  %1146 = vmatpush1.msra.mxu0 0.0
  %1147 = vmatprep.subr.mxu0 0.0
  %1148 = vmatpush1.msra.mxu0 0.0
  %1149 = vmatprep.subr.mxu0 0.0
  %1150 = vmatpush1.msra.mxu0 0.0
  %1151 = vmatprep.mubr.f32.mxu0 0.0
  %1152 = vmatmul.mubr.f32.gmra.mrb[0].mxu0 %v1085
  %v1153 = vpop.f32.mrb[0].mxu0
  %v1154 = vadd.f32 %v209, %v1153
  %v1155 = vpop.f32.mrb[0].mxu0
  %1156 = vdwg.mxu0
  %s1157 = scalar_lea.vmem [#allocation2], 56
  %v1158 = vld [vmem:[%s1157] sm:$0xff]
  %v1159 = vadd.f32 %v1158, %v1154
  %v1160 = vxor.u32 %v1159, 2147483648
  %v1161 = vmul.f32 %v1160, 1.442695
  %v1162 = vpow.pop %v1161
  %v1163 = vadd.f32 %v1162, 1.0
  %v1164 = vrcp.pop %v1163
  %v1165 = vmul.f32 1.0, %v1164
  %1167 = vrot.lane.b32.xlu0 %v1154, 64
  %v1168 = vpop.permute.xlu0 %1167
  %v1170 = vmul.f32 %v1165, %v1168
  %1172 = vrot.lane.b32.xlu0 %v1170, 64
  %v1173 = vpop.permute.xlu0 %1172
  %v1175 = vadd.f32 %v1158, %v1173
  %v1176 = vtanh.pop %v1175
  %v1177 = vsub.f32 1.0, %v1165
  %1179 = vrot.lane.b32.xlu0 %v1176, 96
  %v1180 = vpop.permute.xlu0 %1179
  %v1182 = vmul.f32 %v1177, %v1180
  %v1183 = vmul.f32 %v1165, %v1081
  %v1184 = vadd.f32 %v1182, %v1183
  %s1185 = scalar_lea.vmem %s1, 56
  %v1186 = vld [vmem:[%s1185] sm:$0xff]
  %1188 = vset.pattern.permute.xlu0 0
  %1189 = vperm.xlu0 %1188, %v1186
  %v1190 = vpop.permute.xlu0 %1189
  %v1192 = vmul.f32 %v1190, %v1184
  %1194 = vrot.lane.b32.xlu0 %v1192, 96
  %v1195 = vpop.permute.xlu0 %1194
  %s1197 = scalar_lea.vmem [#allocation3], 56
  %1198 = vst.msk [vmem:[%s1197] sm:$0xff] %vm211, %v1195
  %v1199 = vsub.f32 1.0, %v1186
  %1201 = vset.pattern.permute.xlu0 0
  %1202 = vperm.xlu0 %1201, %v1199
  %v1203 = vpop.permute.xlu0 %1202
  %v1205 = vmul.f32 %v1203, %v1081
  %v1206 = vadd.f32 %v1192, %v1205
  %v1207 = vld [vmem:[#allocation3] sm:$0xff]
  %v1208 = vld [vmem:[#allocation3 + $0x8] sm:$0xff]
  %v1209 = vld [vmem:[#allocation3 + $0x10] sm:$0xff]
  %v1210 = vld [vmem:[#allocation3 + $0x18] sm:$0xff]
  %v1211 = vld [vmem:[#allocation3 + $0x20] sm:$0xff]
  %v1212 = vld [vmem:[#allocation3 + $0x28] sm:$0xff]
  %v1213 = vld [vmem:[#allocation3 + $0x30] sm:$0xff]
  %v1214 = vld [vmem:[#allocation3 + $0x38] sm:$0xff]
  %v1215 = vld [vmem:[%s7] sm:$0xff]
  %v1216 = vld [vmem:[%s7 + $0x8] sm:$0xff]
  %v1217 = vld [vmem:[%s7 + $0x10] sm:$0xff]
  %v1218 = vld [vmem:[%s7 + $0x18] sm:$0xff]
  %v1220 = vsel %vm211, %v1207, 0
  %v1223 = vsel %vm211, %v1208, 0
  %v1226 = vsel %vm211, %v1209, 0
  %v1229 = vsel %vm211, %v1210, 0
  %v1232 = vsel %vm211, %v1211, 0
  %v1235 = vsel %vm211, %v1212, 0
  %v1238 = vsel %vm211, %v1213, 0
  %v1241 = vsel %vm211, %v1214, 0
  %1243 = vmatprep.subr.mxu0 0.0
  %1244 = vmatpush1.msra.mxu0 %v1215
  %1245 = vmatprep.subr.mxu0 0.0
  %1246 = vmatpush1.msra.mxu0 %v1216
  %1247 = vmatprep.subr.mxu0 0.0
  %1248 = vmatpush1.msra.mxu0 %v1217
  %1249 = vmatprep.subr.mxu0 0.0
  %1250 = vmatpush1.msra.mxu0 %v1218
  %1251 = vmatprep.subr.mxu0 0.0
  %1252 = vmatpush1.msra.mxu0 0.0
  %1253 = vmatprep.subr.mxu0 0.0
  %1254 = vmatpush1.msra.mxu0 0.0
  %1255 = vmatprep.subr.mxu0 0.0
  %1256 = vmatpush1.msra.mxu0 0.0
  %1257 = vmatprep.subr.mxu0 0.0
  %1258 = vmatpush1.msra.mxu0 0.0
  %1259 = vmatprep.subr.mxu0 0.0
  %1260 = vmatpush1.msra.mxu0 0.0
  %1261 = vmatprep.subr.mxu0 0.0
  %1262 = vmatpush1.msra.mxu0 0.0
  %1263 = vmatprep.subr.mxu0 0.0
  %1264 = vmatpush1.msra.mxu0 0.0
  %1265 = vmatprep.subr.mxu0 0.0
  %1266 = vmatpush1.msra.mxu0 0.0
  %1267 = vmatprep.subr.mxu0 0.0
  %1268 = vmatpush1.msra.mxu0 0.0
  %1269 = vmatprep.subr.mxu0 0.0
  %1270 = vmatpush1.msra.mxu0 0.0
  %1271 = vmatprep.subr.mxu0 0.0
  %1272 = vmatpush1.msra.mxu0 0.0
  %1273 = vmatprep.subr.mxu0 0.0
  %1274 = vmatpush1.msra.mxu0 0.0
  %1275 = vmatprep.subr.mxu0 0.0
  %1276 = vmatpush1.msra.mxu0 0.0
  %1277 = vmatprep.subr.mxu0 0.0
  %1278 = vmatpush1.msra.mxu0 0.0
  %1279 = vmatprep.subr.mxu0 0.0
  %1280 = vmatpush1.msra.mxu0 0.0
  %1281 = vmatprep.subr.mxu0 0.0
  %1282 = vmatpush1.msra.mxu0 0.0
  %1283 = vmatprep.subr.mxu0 0.0
  %1284 = vmatpush1.msra.mxu0 0.0
  %1285 = vmatprep.subr.mxu0 0.0
  %1286 = vmatpush1.msra.mxu0 0.0
  %1287 = vmatprep.subr.mxu0 0.0
  %1288 = vmatpush1.msra.mxu0 0.0
  %1289 = vmatprep.subr.mxu0 0.0
  %1290 = vmatpush1.msra.mxu0 0.0
  %1291 = vmatprep.subr.mxu0 0.0
  %1292 = vmatpush1.msra.mxu0 0.0
  %1293 = vmatprep.subr.mxu0 0.0
  %1294 = vmatpush1.msra.mxu0 0.0
  %1295 = vmatprep.subr.mxu0 0.0
  %1296 = vmatpush1.msra.mxu0 0.0
  %1297 = vmatprep.subr.mxu0 0.0
  %1298 = vmatpush1.msra.mxu0 0.0
  %1299 = vmatprep.subr.mxu0 0.0
  %1300 = vmatpush1.msra.mxu0 0.0
  %1301 = vmatprep.subr.mxu0 0.0
  %1302 = vmatpush1.msra.mxu0 0.0
  %1303 = vmatprep.subr.mxu0 0.0
  %1304 = vmatpush1.msra.mxu0 0.0
  %1305 = vmatprep.subr.mxu0 0.0
  %1306 = vmatpush1.msra.mxu0 0.0
  %1307 = vmatprep.mubr.f32.mxu0 0.0
  %1308 = vmatmul.mubr.f32.gmra.mrb[0].mxu0 %v1220
  %v1309 = vpop.f32.mrb[0].mxu0
  %v1310 = vadd.f32 0.0, %v1309
  %v1311 = vpop.f32.mrb[0].mxu0
  %1312 = vmatprep.mubr.f32.mxu0 0.0
  %1313 = vmatmul.mubr.f32.gmra.mrb[0].mxu0 %v1223
  %v1314 = vpop.f32.mrb[0].mxu0
  %v1315 = vadd.f32 0.0, %v1314
  %v1316 = vpop.f32.mrb[0].mxu0
  %1317 = vmatprep.mubr.f32.mxu0 0.0
  %1318 = vmatmul.mubr.f32.gmra.mrb[0].mxu0 %v1226
  %v1319 = vpop.f32.mrb[0].mxu0
  %v1320 = vadd.f32 0.0, %v1319
  %v1321 = vpop.f32.mrb[0].mxu0
  %1322 = vmatprep.mubr.f32.mxu0 0.0
  %1323 = vmatmul.mubr.f32.gmra.mrb[0].mxu0 %v1229
  %v1324 = vpop.f32.mrb[0].mxu0
  %v1325 = vadd.f32 0.0, %v1324
  %v1326 = vpop.f32.mrb[0].mxu0
  %1327 = vmatprep.mubr.f32.mxu0 0.0
  %1328 = vmatmul.mubr.f32.gmra.mrb[0].mxu0 %v1232
  %v1329 = vpop.f32.mrb[0].mxu0
  %v1330 = vadd.f32 0.0, %v1329
  %v1331 = vpop.f32.mrb[0].mxu0
  %1332 = vmatprep.mubr.f32.mxu0 0.0
  %1333 = vmatmul.mubr.f32.gmra.mrb[0].mxu0 %v1235
  %v1334 = vpop.f32.mrb[0].mxu0
  %v1335 = vadd.f32 0.0, %v1334
  %v1336 = vpop.f32.mrb[0].mxu0
  %1337 = vmatprep.mubr.f32.mxu0 0.0
  %1338 = vmatmul.mubr.f32.gmra.mrb[0].mxu0 %v1238
  %v1339 = vpop.f32.mrb[0].mxu0
  %v1340 = vadd.f32 0.0, %v1339
  %v1341 = vpop.f32.mrb[0].mxu0
  %1342 = vmatprep.mubr.f32.mxu0 0.0
  %1343 = vmatmul.mubr.f32.gmra.mrb[0].mxu0 %v1241
  %v1344 = vpop.f32.mrb[0].mxu0
  %v1345 = vadd.f32 0.0, %v1344
  %v1346 = vpop.f32.mrb[0].mxu0
  %1347 = vdwg.mxu0
  %v1348 = vld [vmem:[%s8] sm:$0xff]
  %v1349 = vld [vmem:[%s8 + $0x8] sm:$0xff]
  %v1350 = vld [vmem:[%s8 + $0x10] sm:$0xff]
  %v1351 = vld [vmem:[%s8 + $0x18] sm:$0xff]
  %1353 = vrot.lane.b32.xlu0 %v1206, 96
  %v1354 = vpop.permute.xlu0 %1353
  %v1355 = vsel %vm211, %v1354, 0
  %1357 = vmatprep.subr.mxu0 0.0
  %1358 = vmatpush1.msra.mxu0 %v1348
  %1359 = vmatprep.subr.mxu0 0.0
  %1360 = vmatpush1.msra.mxu0 %v1349
  %1361 = vmatprep.subr.mxu0 0.0
  %1362 = vmatpush1.msra.mxu0 %v1350
  %1363 = vmatprep.subr.mxu0 0.0
  %1364 = vmatpush1.msra.mxu0 %v1351
  %1365 = vmatprep.subr.mxu0 0.0
  %1366 = vmatpush1.msra.mxu0 0.0
  %1367 = vmatprep.subr.mxu0 0.0
  %1368 = vmatpush1.msra.mxu0 0.0
  %1369 = vmatprep.subr.mxu0 0.0
  %1370 = vmatpush1.msra.mxu0 0.0
  %1371 = vmatprep.subr.mxu0 0.0
  %1372 = vmatpush1.msra.mxu0 0.0
  %1373 = vmatprep.subr.mxu0 0.0
  %1374 = vmatpush1.msra.mxu0 0.0
  %1375 = vmatprep.subr.mxu0 0.0
  %1376 = vmatpush1.msra.mxu0 0.0
  %1377 = vmatprep.subr.mxu0 0.0
  %1378 = vmatpush1.msra.mxu0 0.0
  %1379 = vmatprep.subr.mxu0 0.0
  %1380 = vmatpush1.msra.mxu0 0.0
  %1381 = vmatprep.subr.mxu0 0.0
  %1382 = vmatpush1.msra.mxu0 0.0
  %1383 = vmatprep.subr.mxu0 0.0
  %1384 = vmatpush1.msra.mxu0 0.0
  %1385 = vmatprep.subr.mxu0 0.0
  %1386 = vmatpush1.msra.mxu0 0.0
  %1387 = vmatprep.subr.mxu0 0.0
  %1388 = vmatpush1.msra.mxu0 0.0
  %1389 = vmatprep.subr.mxu0 0.0
  %1390 = vmatpush1.msra.mxu0 0.0
  %1391 = vmatprep.subr.mxu0 0.0
  %1392 = vmatpush1.msra.mxu0 0.0
  %1393 = vmatprep.subr.mxu0 0.0
  %1394 = vmatpush1.msra.mxu0 0.0
  %1395 = vmatprep.subr.mxu0 0.0
  %1396 = vmatpush1.msra.mxu0 0.0
  %1397 = vmatprep.subr.mxu0 0.0
  %1398 = vmatpush1.msra.mxu0 0.0
  %1399 = vmatprep.subr.mxu0 0.0
  %1400 = vmatpush1.msra.mxu0 0.0
  %1401 = vmatprep.subr.mxu0 0.0
  %1402 = vmatpush1.msra.mxu0 0.0
  %1403 = vmatprep.subr.mxu0 0.0
  %1404 = vmatpush1.msra.mxu0 0.0
  %1405 = vmatprep.subr.mxu0 0.0
  %1406 = vmatpush1.msra.mxu0 0.0
  %1407 = vmatprep.subr.mxu0 0.0
  %1408 = vmatpush1.msra.mxu0 0.0
  %1409 = vmatprep.subr.mxu0 0.0
  %1410 = vmatpush1.msra.mxu0 0.0
  %1411 = vmatprep.subr.mxu0 0.0
  %1412 = vmatpush1.msra.mxu0 0.0
  %1413 = vmatprep.subr.mxu0 0.0
  %1414 = vmatpush1.msra.mxu0 0.0
  %1415 = vmatprep.subr.mxu0 0.0
  %1416 = vmatpush1.msra.mxu0 0.0
  %1417 = vmatprep.subr.mxu0 0.0
  %1418 = vmatpush1.msra.mxu0 0.0
  %1419 = vmatprep.subr.mxu0 0.0
  %1420 = vmatpush1.msra.mxu0 0.0
  %1421 = vmatprep.mubr.f32.mxu0 0.0
  %1422 = vmatmul.mubr.f32.gmra.mrb[0].mxu0 %v1355
  %v1423 = vpop.f32.mrb[0].mxu0
  %v1424 = vadd.f32 0.0, %v1423
  %v1425 = vpop.f32.mrb[0].mxu0
  %1426 = vdwg.mxu0
  %v1427 = vld [vmem:[%s2] sm:$0xff]
  %v1428 = vld [vmem:[%s2 + $0x8] sm:$0xff]
  %v1429 = vld [vmem:[%s2 + $0x10] sm:$0xff]
  %v1430 = vld [vmem:[%s2 + $0x18] sm:$0xff]
  %v1431 = vld [vmem:[%s2 + $0x20] sm:$0xff]
  %v1432 = vld [vmem:[%s2 + $0x28] sm:$0xff]
  %v1433 = vld [vmem:[%s2 + $0x30] sm:$0xff]
  %v1434 = vld [vmem:[%s2 + $0x38] sm:$0xff]
  %1436 = vset.pattern.permute.xlu0 0
  %1437 = vperm.xlu0 %1436, %v1427
  %v1438 = vpop.permute.xlu0 %1437
  %1441 = vset.pattern.permute.xlu0 0
  %1442 = vperm.xlu0 %1441, %v1428
  %v1443 = vpop.permute.xlu0 %1442
  %1446 = vset.pattern.permute.xlu0 0
  %1447 = vperm.xlu0 %1446, %v1429
  %v1448 = vpop.permute.xlu0 %1447
  %1451 = vset.pattern.permute.xlu0 0
  %1452 = vperm.xlu0 %1451, %v1430
  %v1453 = vpop.permute.xlu0 %1452
  %1456 = vset.pattern.permute.xlu0 0
  %1457 = vperm.xlu0 %1456, %v1431
  %v1458 = vpop.permute.xlu0 %1457
  %1461 = vset.pattern.permute.xlu0 0
  %1462 = vperm.xlu0 %1461, %v1432
  %v1463 = vpop.permute.xlu0 %1462
  %1466 = vset.pattern.permute.xlu0 0
  %1467 = vperm.xlu0 %1466, %v1433
  %v1468 = vpop.permute.xlu0 %1467
  %1471 = vset.pattern.permute.xlu0 0
  %1472 = vperm.xlu0 %1471, %v1434
  %v1473 = vpop.permute.xlu0 %1472
  %v1475 = vmul.f32 %v1438, %v1424
  %v1476 = vmul.f32 %v1443, %v1424
  %v1477 = vmul.f32 %v1448, %v1424
  %v1478 = vmul.f32 %v1453, %v1424
  %v1479 = vmul.f32 %v1458, %v1424
  %v1480 = vmul.f32 %v1463, %v1424
  %v1481 = vmul.f32 %v1468, %v1424
  %v1482 = vmul.f32 %v1473, %v1424
  %v1483 = vadd.f32 %v1310, %v1475
  %v1484 = vadd.f32 %v1315, %v1476
  %v1485 = vadd.f32 %v1320, %v1477
  %v1486 = vadd.f32 %v1325, %v1478
  %v1487 = vadd.f32 %v1330, %v1479
  %v1488 = vadd.f32 %v1335, %v1480
  %v1489 = vadd.f32 %v1340, %v1481
  %v1490 = vadd.f32 %v1345, %v1482
  %v1491 = vxor.u32 %v1483, 2147483648
  %v1492 = vxor.u32 %v1484, 2147483648
  %v1493 = vxor.u32 %v1485, 2147483648
  %v1494 = vxor.u32 %v1486, 2147483648
  %v1495 = vxor.u32 %v1487, 2147483648
  %v1496 = vxor.u32 %v1488, 2147483648
  %v1497 = vxor.u32 %v1489, 2147483648
  %v1498 = vxor.u32 %v1490, 2147483648
  %v1499 = vmul.f32 %v1491, 1.442695
  %v1500 = vpow.pop %v1499
  %v1501 = vmul.f32 %v1492, 1.442695
  %v1502 = vpow.pop %v1501
  %v1503 = vmul.f32 %v1493, 1.442695
  %v1504 = vpow.pop %v1503
  %v1505 = vmul.f32 %v1494, 1.442695
  %v1506 = vpow.pop %v1505
  %v1507 = vmul.f32 %v1495, 1.442695
  %v1508 = vpow.pop %v1507
  %v1509 = vmul.f32 %v1496, 1.442695
  %v1510 = vpow.pop %v1509
  %v1511 = vmul.f32 %v1497, 1.442695
  %v1512 = vpow.pop %v1511
  %v1513 = vmul.f32 %v1498, 1.442695
  %v1514 = vpow.pop %v1513
  %v1515 = vadd.f32 %v1500, 1.0
  %v1516 = vadd.f32 %v1502, 1.0
  %v1517 = vadd.f32 %v1504, 1.0
  %v1518 = vadd.f32 %v1506, 1.0
  %v1519 = vadd.f32 %v1508, 1.0
  %v1520 = vadd.f32 %v1510, 1.0
  %v1521 = vadd.f32 %v1512, 1.0
  %v1522 = vadd.f32 %v1514, 1.0
  %v1523 = vrcp.pop %v1515
  %v1524 = vmul.f32 1.0, %v1523
  %v1525 = vrcp.pop %v1516
  %v1526 = vmul.f32 1.0, %v1525
  %v1527 = vrcp.pop %v1517
  %v1528 = vmul.f32 1.0, %v1527
  %v1529 = vrcp.pop %v1518
  %v1530 = vmul.f32 1.0, %v1529
  %v1531 = vrcp.pop %v1519
  %v1532 = vmul.f32 1.0, %v1531
  %v1533 = vrcp.pop %v1520
  %v1534 = vmul.f32 1.0, %v1533
  %v1535 = vrcp.pop %v1521
  %v1536 = vmul.f32 1.0, %v1535
  %v1537 = vrcp.pop %v1522
  %v1538 = vmul.f32 1.0, %v1537
  %v1539 = vld [vmem:[%s9] sm:$0x1]
  %v1541 = vlaneseq
  %v1542 = vshrl.u32 %v1541, 7
  %v1543 = vsub.s32 0, %v1542
  %v1544 = vrot.slane %v1539, %v1543
  %v1546 = vmul.f32 %v1524, %v1544
  %v1547 = vmul.f32 %v1526, %v1544
  %v1548 = vmul.f32 %v1528, %v1544
  %v1549 = vmul.f32 %v1530, %v1544
  %v1550 = vmul.f32 %v1532, %v1544
  %v1551 = vmul.f32 %v1534, %v1544
  %v1552 = vmul.f32 %v1536, %v1544
  %v1553 = vmul.f32 %v1538, %v1544
  %v1554 = vsel %vm211, %v1546, 0.0
  %1555 = vadd.xlane.f32.xlu0 %v1554
  %v1556 = vpop.xlane.xlu0 %1555
  %v1557 = vsel %vm211, %v1547, 0.0
  %1558 = vadd.xlane.f32.xlu0 %v1557
  %v1559 = vpop.xlane.xlu0 %1558
  %v1560 = vsel %vm211, %v1548, 0.0
  %1561 = vadd.xlane.f32.xlu0 %v1560
  %v1562 = vpop.xlane.xlu0 %1561
  %v1563 = vsel %vm211, %v1549, 0.0
  %1564 = vadd.xlane.f32.xlu0 %v1563
  %v1565 = vpop.xlane.xlu0 %1564
  %v1566 = vsel %vm211, %v1550, 0.0
  %1567 = vadd.xlane.f32.xlu0 %v1566
  %v1568 = vpop.xlane.xlu0 %1567
  %v1569 = vsel %vm211, %v1551, 0.0
  %1570 = vadd.xlane.f32.xlu0 %v1569
  %v1571 = vpop.xlane.xlu0 %1570
  %v1572 = vsel %vm211, %v1552, 0.0
  %1573 = vadd.xlane.f32.xlu0 %v1572
  %v1574 = vpop.xlane.xlu0 %1573
  %v1575 = vsel %vm211, %v1553, 0.0
  %1576 = vadd.xlane.f32.xlu0 %v1575
  %v1577 = vpop.xlane.xlu0 %1576
  %v1578 = vmul.f32 %v1556, %v1207
  %v1579 = vmul.f32 %v1559, %v1208
  %v1580 = vmul.f32 %v1562, %v1209
  %v1581 = vmul.f32 %v1565, %v1210
  %v1582 = vmul.f32 %v1568, %v1211
  %v1583 = vmul.f32 %v1571, %v1212
  %v1584 = vmul.f32 %v1574, %v1213
  %v1585 = vmul.f32 %v1577, %v1214
  %v1586 = vsel %vm211, %v1578, 0.0
  %v1587 = vsel %vm211, %v1579, 0.0
  %v1588 = vadd.f32 %v1586, %v1587
  %v1589 = vsel %vm211, %v1580, 0.0
  %v1590 = vadd.f32 %v1588, %v1589
  %v1591 = vsel %vm211, %v1581, 0.0
  %v1592 = vadd.f32 %v1590, %v1591
  %v1593 = vsel %vm211, %v1582, 0.0
  %v1594 = vadd.f32 %v1592, %v1593
  %v1595 = vsel %vm211, %v1583, 0.0
  %v1596 = vadd.f32 %v1594, %v1595
  %v1597 = vsel %vm211, %v1584, 0.0
  %v1598 = vadd.f32 %v1596, %v1597
  %v1599 = vsel %vm211, %v1585, 0.0
  %v1600 = vadd.f32 %v1598, %v1599
  %v1601 = vld [vmem:[%s10] sm:$0xff]
  %v1602 = vld [vmem:[%s10 + $0x8] sm:$0xff]
  %v1603 = vld [vmem:[%s10 + $0x10] sm:$0xff]
  %v1604 = vld [vmem:[%s10 + $0x18] sm:$0xff]
  %v1605 = vld [vmem:[%s11] sm:$0xff]
  %v1606 = vld [vmem:[%s11 + $0x8] sm:$0xff]
  %v1607 = vld [vmem:[%s11 + $0x10] sm:$0xff]
  %v1608 = vld [vmem:[%s11 + $0x18] sm:$0xff]
  %1609 = vmatprep.subr.mxu0 0.0
  %1610 = vmatpush1.msra.mxu0 %v1605
  %1611 = vmatprep.subr.mxu0 0.0
  %1612 = vmatpush1.msra.mxu0 %v1606
  %1613 = vmatprep.subr.mxu0 0.0
  %1614 = vmatpush1.msra.mxu0 %v1607
  %1615 = vmatprep.subr.mxu0 0.0
  %1616 = vmatpush1.msra.mxu0 %v1608
  %1617 = vmatprep.subr.mxu0 0.0
  %1618 = vmatpush1.msra.mxu0 0.0
  %1619 = vmatprep.subr.mxu0 0.0
  %1620 = vmatpush1.msra.mxu0 0.0
  %1621 = vmatprep.subr.mxu0 0.0
  %1622 = vmatpush1.msra.mxu0 0.0
  %1623 = vmatprep.subr.mxu0 0.0
  %1624 = vmatpush1.msra.mxu0 0.0
  %1625 = vmatprep.subr.mxu0 0.0
  %1626 = vmatpush1.msra.mxu0 0.0
  %1627 = vmatprep.subr.mxu0 0.0
  %1628 = vmatpush1.msra.mxu0 0.0
  %1629 = vmatprep.subr.mxu0 0.0
  %1630 = vmatpush1.msra.mxu0 0.0
  %1631 = vmatprep.subr.mxu0 0.0
  %1632 = vmatpush1.msra.mxu0 0.0
  %1633 = vmatprep.subr.mxu0 0.0
  %1634 = vmatpush1.msra.mxu0 0.0
  %1635 = vmatprep.subr.mxu0 0.0
  %1636 = vmatpush1.msra.mxu0 0.0
  %1637 = vmatprep.subr.mxu0 0.0
  %1638 = vmatpush1.msra.mxu0 0.0
  %1639 = vmatprep.subr.mxu0 0.0
  %1640 = vmatpush1.msra.mxu0 0.0
  %1641 = vmatprep.subr.mxu0 0.0
  %1642 = vmatpush1.msra.mxu0 0.0
  %1643 = vmatprep.subr.mxu0 0.0
  %1644 = vmatpush1.msra.mxu0 0.0
  %1645 = vmatprep.subr.mxu0 0.0
  %1646 = vmatpush1.msra.mxu0 0.0
  %1647 = vmatprep.subr.mxu0 0.0
  %1648 = vmatpush1.msra.mxu0 0.0
  %1649 = vmatprep.subr.mxu0 0.0
  %1650 = vmatpush1.msra.mxu0 0.0
  %1651 = vmatprep.subr.mxu0 0.0
  %1652 = vmatpush1.msra.mxu0 0.0
  %1653 = vmatprep.subr.mxu0 0.0
  %1654 = vmatpush1.msra.mxu0 0.0
  %1655 = vmatprep.subr.mxu0 0.0
  %1656 = vmatpush1.msra.mxu0 0.0
  %1657 = vmatprep.subr.mxu0 0.0
  %1658 = vmatpush1.msra.mxu0 0.0
  %1659 = vmatprep.subr.mxu0 0.0
  %1660 = vmatpush1.msra.mxu0 0.0
  %1661 = vmatprep.subr.mxu0 0.0
  %1662 = vmatpush1.msra.mxu0 0.0
  %1663 = vmatprep.subr.mxu0 0.0
  %1664 = vmatpush1.msra.mxu0 0.0
  %1665 = vmatprep.subr.mxu0 0.0
  %1666 = vmatpush1.msra.mxu0 0.0
  %1667 = vmatprep.subr.mxu0 0.0
  %1668 = vmatpush1.msra.mxu0 0.0
  %1669 = vmatprep.subr.mxu0 0.0
  %1670 = vmatpush1.msra.mxu0 0.0
  %1671 = vmatprep.subr.mxu0 0.0
  %1672 = vmatpush1.msra.mxu0 0.0
  %1673 = vmatprep.mubr.f32.mxu0 0.0
  %1674 = vmatmul.mubr.f32.gmra.mrb[0].mxu0 %v1355
  %v1675 = vpop.f32.mrb[0].mxu0
  %v1676 = vadd.f32 0.0, %v1675
  %v1677 = vpop.f32.mrb[0].mxu0
  %1678 = vdwg.mxu0
  %v1680 = vsel %vm211, %v1600, 0
  %1682 = vmatprep.subr.mxu0 0.0
  %1683 = vmatpush1.msra.mxu0 %v1601
  %1684 = vmatprep.subr.mxu0 0.0
  %1685 = vmatpush1.msra.mxu0 %v1602
  %1686 = vmatprep.subr.mxu0 0.0
  %1687 = vmatpush1.msra.mxu0 %v1603
  %1688 = vmatprep.subr.mxu0 0.0
  %1689 = vmatpush1.msra.mxu0 %v1604
  %1690 = vmatprep.subr.mxu0 0.0
  %1691 = vmatpush1.msra.mxu0 0.0
  %1692 = vmatprep.subr.mxu0 0.0
  %1693 = vmatpush1.msra.mxu0 0.0
  %1694 = vmatprep.subr.mxu0 0.0
  %1695 = vmatpush1.msra.mxu0 0.0
  %1696 = vmatprep.subr.mxu0 0.0
  %1697 = vmatpush1.msra.mxu0 0.0
  %1698 = vmatprep.subr.mxu0 0.0
  %1699 = vmatpush1.msra.mxu0 0.0
  %1700 = vmatprep.subr.mxu0 0.0
  %1701 = vmatpush1.msra.mxu0 0.0
  %1702 = vmatprep.subr.mxu0 0.0
  %1703 = vmatpush1.msra.mxu0 0.0
  %1704 = vmatprep.subr.mxu0 0.0
  %1705 = vmatpush1.msra.mxu0 0.0
  %1706 = vmatprep.subr.mxu0 0.0
  %1707 = vmatpush1.msra.mxu0 0.0
  %1708 = vmatprep.subr.mxu0 0.0
  %1709 = vmatpush1.msra.mxu0 0.0
  %1710 = vmatprep.subr.mxu0 0.0
  %1711 = vmatpush1.msra.mxu0 0.0
  %1712 = vmatprep.subr.mxu0 0.0
  %1713 = vmatpush1.msra.mxu0 0.0
  %1714 = vmatprep.subr.mxu0 0.0
  %1715 = vmatpush1.msra.mxu0 0.0
  %1716 = vmatprep.subr.mxu0 0.0
  %1717 = vmatpush1.msra.mxu0 0.0
  %1718 = vmatprep.subr.mxu0 0.0
  %1719 = vmatpush1.msra.mxu0 0.0
  %1720 = vmatprep.subr.mxu0 0.0
  %1721 = vmatpush1.msra.mxu0 0.0
  %1722 = vmatprep.subr.mxu0 0.0
  %1723 = vmatpush1.msra.mxu0 0.0
  %1724 = vmatprep.subr.mxu0 0.0
  %1725 = vmatpush1.msra.mxu0 0.0
  %1726 = vmatprep.subr.mxu0 0.0
  %1727 = vmatpush1.msra.mxu0 0.0
  %1728 = vmatprep.subr.mxu0 0.0
  %1729 = vmatpush1.msra.mxu0 0.0
  %1730 = vmatprep.subr.mxu0 0.0
  %1731 = vmatpush1.msra.mxu0 0.0
  %1732 = vmatprep.subr.mxu0 0.0
  %1733 = vmatpush1.msra.mxu0 0.0
  %1734 = vmatprep.subr.mxu0 0.0
  %1735 = vmatpush1.msra.mxu0 0.0
  %1736 = vmatprep.subr.mxu0 0.0
  %1737 = vmatpush1.msra.mxu0 0.0
  %1738 = vmatprep.subr.mxu0 0.0
  %1739 = vmatpush1.msra.mxu0 0.0
  %1740 = vmatprep.subr.mxu0 0.0
  %1741 = vmatpush1.msra.mxu0 0.0
  %1742 = vmatprep.subr.mxu0 0.0
  %1743 = vmatpush1.msra.mxu0 0.0
  %1744 = vmatprep.subr.mxu0 0.0
  %1745 = vmatpush1.msra.mxu0 0.0
  %1746 = vmatprep.mubr.f32.mxu0 0.0
  %1747 = vmatmul.mubr.f32.gmra.mrb[0].mxu0 %v1680
  %v1748 = vpop.f32.mrb[0].mxu0
  %v1749 = vadd.f32 %v1676, %v1748
  %v1750 = vpop.f32.mrb[0].mxu0
  %1751 = vdwg.mxu0
  %v1752 = vld [vmem:[%s12] sm:$0xff]
  %v1753 = vld [vmem:[%s12 + $0x8] sm:$0xff]
  %v1754 = vld [vmem:[%s12 + $0x10] sm:$0xff]
  %v1755 = vld [vmem:[%s12 + $0x18] sm:$0xff]
  %v1756 = vld [vmem:[%s12 + $0x20] sm:$0xff]
  %v1757 = vld [vmem:[%s12 + $0x28] sm:$0xff]
  %v1758 = vld [vmem:[%s12 + $0x30] sm:$0xff]
  %v1759 = vld [vmem:[%s12 + $0x38] sm:$0xff]
  %v1760 = vld [vmem:[%s12 + $0x40] sm:$0xff]
  %v1761 = vld [vmem:[%s12 + $0x48] sm:$0xff]
  %v1762 = vld [vmem:[%s12 + $0x50] sm:$0xff]
  %v1763 = vld [vmem:[%s12 + $0x58] sm:$0xff]
  %v1764 = vld [vmem:[%s12 + $0x60] sm:$0xff]
  %v1765 = vld [vmem:[%s12 + $0x68] sm:$0xff]
  %v1766 = vld [vmem:[%s12 + $0x70] sm:$0xff]
  %v1767 = vld [vmem:[%s12 + $0x78] sm:$0xff]
  %v1768 = vld [vmem:[%s12 + $0x80] sm:$0xff]
  %v1769 = vld [vmem:[%s12 + $0x88] sm:$0xff]
  %v1770 = vld [vmem:[%s12 + $0x90] sm:$0xff]
  %v1771 = vld [vmem:[%s12 + $0x98] sm:$0xff]
  %v1772 = vld [vmem:[%s12 + $0xa0] sm:$0xff]
  %v1773 = vld [vmem:[%s12 + $0xa8] sm:$0xff]
  %v1774 = vld [vmem:[%s12 + $0xb0] sm:$0xff]
  %v1775 = vld [vmem:[%s12 + $0xb8] sm:$0xff]
  %v1776 = vld [vmem:[%s12 + $0xc0] sm:$0xff]
  %v1777 = vld [vmem:[%s12 + $0xc8] sm:$0xff]
  %v1778 = vld [vmem:[%s12 + $0xd0] sm:$0xff]
  %v1779 = vld [vmem:[%s12 + $0xd8] sm:$0xff]
  %v1780 = vld [vmem:[%s12 + $0xe0] sm:$0xff]
  %v1781 = vld [vmem:[%s12 + $0xe8] sm:$0xff]
  %v1782 = vld [vmem:[%s12 + $0xf0] sm:$0xff]
  %v1783 = vld [vmem:[%s12 + $0xf8] sm:$0xff]
  %v1784 = vld [vmem:[%s12 + $0x100] sm:$0xff]
  %v1785 = vld [vmem:[%s12 + $0x108] sm:$0xff]
  %v1786 = vld [vmem:[%s12 + $0x110] sm:$0xff]
  %v1787 = vld [vmem:[%s12 + $0x118] sm:$0xff]
  %v1788 = vld [vmem:[%s12 + $0x120] sm:$0xff]
  %v1789 = vld [vmem:[%s12 + $0x128] sm:$0xff]
  %v1790 = vld [vmem:[%s12 + $0x130] sm:$0xff]
  %v1791 = vld [vmem:[%s12 + $0x138] sm:$0xff]
  %v1792 = vld [vmem:[%s12 + $0x140] sm:$0xff]
  %v1793 = vld [vmem:[%s12 + $0x148] sm:$0xff]
  %v1794 = vld [vmem:[%s12 + $0x150] sm:$0xff]
  %v1795 = vld [vmem:[%s12 + $0x158] sm:$0xff]
  %v1796 = vld [vmem:[%s12 + $0x160] sm:$0xff]
  %v1797 = vld [vmem:[%s12 + $0x168] sm:$0xff]
  %v1798 = vld [vmem:[%s12 + $0x170] sm:$0xff]
  %v1799 = vld [vmem:[%s12 + $0x178] sm:$0xff]
  %v1800 = vld [vmem:[%s12 + $0x180] sm:$0xff]
  %v1801 = vld [vmem:[%s12 + $0x188] sm:$0xff]
  %v1802 = vld [vmem:[%s12 + $0x190] sm:$0xff]
  %v1803 = vld [vmem:[%s12 + $0x198] sm:$0xff]
  %v1804 = vld [vmem:[%s12 + $0x1a0] sm:$0xff]
  %v1805 = vld [vmem:[%s12 + $0x1a8] sm:$0xff]
  %v1806 = vld [vmem:[%s12 + $0x1b0] sm:$0xff]
  %v1807 = vld [vmem:[%s12 + $0x1b8] sm:$0xff]
  %v1808 = vld [vmem:[%s12 + $0x1c0] sm:$0xff]
  %v1809 = vld [vmem:[%s12 + $0x1c8] sm:$0xff]
  %v1810 = vld [vmem:[%s12 + $0x1d0] sm:$0xff]
  %v1811 = vld [vmem:[%s12 + $0x1d8] sm:$0xff]
  %v1812 = vld [vmem:[%s12 + $0x1e0] sm:$0xff]
  %v1813 = vld [vmem:[%s12 + $0x1e8] sm:$0xff]
  %v1814 = vld [vmem:[%s12 + $0x1f0] sm:$0xff]
  %v1815 = vld [vmem:[%s12 + $0x1f8] sm:$0xff]
  %v1817 = vsel %vm61, %v1749, 0
  %v1820 = vsel %vm61, %v1752, 0
  %v1823 = vsel %vm61, %v1753, 0
  %v1826 = vsel %vm61, %v1754, 0
  %v1829 = vsel %vm61, %v1755, 0
  %v1832 = vsel %vm61, %v1756, 0
  %v1835 = vsel %vm61, %v1757, 0
  %v1838 = vsel %vm61, %v1758, 0
  %v1841 = vsel %vm61, %v1759, 0
  %v1844 = vsel %vm61, %v1760, 0
  %v1847 = vsel %vm61, %v1761, 0
  %v1850 = vsel %vm61, %v1762, 0
  %v1853 = vsel %vm61, %v1763, 0
  %v1856 = vsel %vm61, %v1764, 0
  %v1859 = vsel %vm61, %v1765, 0
  %v1862 = vsel %vm61, %v1766, 0
  %v1865 = vsel %vm61, %v1767, 0
  %v1868 = vsel %vm61, %v1768, 0
  %v1871 = vsel %vm61, %v1769, 0
  %v1874 = vsel %vm61, %v1770, 0
  %v1877 = vsel %vm61, %v1771, 0
  %v1880 = vsel %vm61, %v1772, 0
  %v1883 = vsel %vm61, %v1773, 0
  %v1886 = vsel %vm61, %v1774, 0
  %v1889 = vsel %vm61, %v1775, 0
  %v1892 = vsel %vm61, %v1776, 0
  %v1895 = vsel %vm61, %v1777, 0
  %v1898 = vsel %vm61, %v1778, 0
  %v1901 = vsel %vm61, %v1779, 0
  %v1904 = vsel %vm61, %v1780, 0
  %v1907 = vsel %vm61, %v1781, 0
  %v1910 = vsel %vm61, %v1782, 0
  %v1913 = vsel %vm61, %v1783, 0
  %v1916 = vsel %vm61, %v1784, 0
  %v1919 = vsel %vm61, %v1785, 0
  %v1922 = vsel %vm61, %v1786, 0
  %v1925 = vsel %vm61, %v1787, 0
  %v1928 = vsel %vm61, %v1788, 0
  %v1931 = vsel %vm61, %v1789, 0
  %v1934 = vsel %vm61, %v1790, 0
  %v1937 = vsel %vm61, %v1791, 0
  %v1940 = vsel %vm61, %v1792, 0
  %v1943 = vsel %vm61, %v1793, 0
  %v1946 = vsel %vm61, %v1794, 0
  %v1949 = vsel %vm61, %v1795, 0
  %v1952 = vsel %vm61, %v1796, 0
  %v1955 = vsel %vm61, %v1797, 0
  %v1958 = vsel %vm61, %v1798, 0
  %v1961 = vsel %vm61, %v1799, 0
  %v1964 = vsel %vm61, %v1800, 0
  %v1967 = vsel %vm61, %v1801, 0
  %v1970 = vsel %vm61, %v1802, 0
  %v1973 = vsel %vm61, %v1803, 0
  %v1976 = vsel %vm61, %v1804, 0
  %v1979 = vsel %vm61, %v1805, 0
  %v1982 = vsel %vm61, %v1806, 0
  %v1985 = vsel %vm61, %v1807, 0
  %v1988 = vsel %vm61, %v1808, 0
  %v1991 = vsel %vm61, %v1809, 0
  %v1994 = vsel %vm61, %v1810, 0
  %v1997 = vsel %vm61, %v1811, 0
  %v2000 = vsel %vm61, %v1812, 0
  %v2003 = vsel %vm61, %v1813, 0
  %v2006 = vsel %vm61, %v1814, 0
  %v2009 = vsel %vm61, %v1815, 0
  %2011 = vmatprep.subr.mxu0 0.0
  %2012 = vmatpush1.xpose.msra.mxu0 %v1820
  %2013 = vmatprep.subr.mxu0 0.0
  %2014 = vmatpush1.xpose.msra.mxu0 %v1823
  %2015 = vmatprep.subr.mxu0 0.0
  %2016 = vmatpush1.xpose.msra.mxu0 %v1826
  %2017 = vmatprep.subr.mxu0 0.0
  %2018 = vmatpush1.xpose.msra.mxu0 %v1829
  %2019 = vmatprep.subr.mxu0 0.0
  %2020 = vmatpush1.xpose.msra.mxu0 %v1832
  %2021 = vmatprep.subr.mxu0 0.0
  %2022 = vmatpush1.xpose.msra.mxu0 %v1835
  %2023 = vmatprep.subr.mxu0 0.0
  %2024 = vmatpush1.xpose.msra.mxu0 %v1838
  %2025 = vmatprep.subr.mxu0 0.0
  %2026 = vmatpush1.xpose.msra.mxu0 %v1841
  %2027 = vmatprep.subr.mxu0 0.0
  %2028 = vmatpush1.xpose.msra.mxu0 %v1844
  %2029 = vmatprep.subr.mxu0 0.0
  %2030 = vmatpush1.xpose.msra.mxu0 %v1847
  %2031 = vmatprep.subr.mxu0 0.0
  %2032 = vmatpush1.xpose.msra.mxu0 %v1850
  %2033 = vmatprep.subr.mxu0 0.0
  %2034 = vmatpush1.xpose.msra.mxu0 %v1853
  %2035 = vmatprep.subr.mxu0 0.0
  %2036 = vmatpush1.xpose.msra.mxu0 %v1856
  %2037 = vmatprep.subr.mxu0 0.0
  %2038 = vmatpush1.xpose.msra.mxu0 %v1859
  %2039 = vmatprep.subr.mxu0 0.0
  %2040 = vmatpush1.xpose.msra.mxu0 %v1862
  %2041 = vmatprep.subr.mxu0 0.0
  %2042 = vmatpush1.xpose.msra.mxu0 %v1865
  %2043 = vmatprep.subr.mxu0 0.0
  %2044 = vmatpush1.xpose.msra.mxu0 %v1868
  %2045 = vmatprep.subr.mxu0 0.0
  %2046 = vmatpush1.xpose.msra.mxu0 %v1871
  %2047 = vmatprep.subr.mxu0 0.0
  %2048 = vmatpush1.xpose.msra.mxu0 %v1874
  %2049 = vmatprep.subr.mxu0 0.0
  %2050 = vmatpush1.xpose.msra.mxu0 %v1877
  %2051 = vmatprep.subr.mxu0 0.0
  %2052 = vmatpush1.xpose.msra.mxu0 %v1880
  %2053 = vmatprep.subr.mxu0 0.0
  %2054 = vmatpush1.xpose.msra.mxu0 %v1883
  %2055 = vmatprep.subr.mxu0 0.0
  %2056 = vmatpush1.xpose.msra.mxu0 %v1886
  %2057 = vmatprep.subr.mxu0 0.0
  %2058 = vmatpush1.xpose.msra.mxu0 %v1889
  %2059 = vmatprep.subr.mxu0 0.0
  %2060 = vmatpush1.xpose.msra.mxu0 %v1892
  %2061 = vmatprep.subr.mxu0 0.0
  %2062 = vmatpush1.xpose.msra.mxu0 %v1895
  %2063 = vmatprep.subr.mxu0 0.0
  %2064 = vmatpush1.xpose.msra.mxu0 %v1898
  %2065 = vmatprep.subr.mxu0 0.0
  %2066 = vmatpush1.xpose.msra.mxu0 %v1901
  %2067 = vmatprep.subr.mxu0 0.0
  %2068 = vmatpush1.xpose.msra.mxu0 %v1904
  %2069 = vmatprep.subr.mxu0 0.0
  %2070 = vmatpush1.xpose.msra.mxu0 %v1907
  %2071 = vmatprep.subr.mxu0 0.0
  %2072 = vmatpush1.xpose.msra.mxu0 %v1910
  %2073 = vmatprep.subr.mxu0 0.0
  %2074 = vmatpush1.xpose.msra.mxu0 %v1913
  %2075 = vmatprep.mubr.f32.mxu0 0.0
  %2076 = vmatmul.mubr.f32.gmra.mrb[0].mxu0 %v1817
  %v2077 = vpop.f32.mrb[0].mxu0
  %v2078 = vadd.f32 0.0, %v2077
  %v2079 = vpop.f32.mrb[0].mxu0
  %v2080 = vadd.f32 0.0, %v2079
  %2081 = vdwg.mxu0
  %2082 = vmatprep.subr.mxu0 0.0
  %2083 = vmatpush1.xpose.msra.mxu0 %v1916
  %2084 = vmatprep.subr.mxu0 0.0
  %2085 = vmatpush1.xpose.msra.mxu0 %v1919
  %2086 = vmatprep.subr.mxu0 0.0
  %2087 = vmatpush1.xpose.msra.mxu0 %v1922
  %2088 = vmatprep.subr.mxu0 0.0
  %2089 = vmatpush1.xpose.msra.mxu0 %v1925
  %2090 = vmatprep.subr.mxu0 0.0
  %2091 = vmatpush1.xpose.msra.mxu0 %v1928
  %2092 = vmatprep.subr.mxu0 0.0
  %2093 = vmatpush1.xpose.msra.mxu0 %v1931
  %2094 = vmatprep.subr.mxu0 0.0
  %2095 = vmatpush1.xpose.msra.mxu0 %v1934
  %2096 = vmatprep.subr.mxu0 0.0
  %2097 = vmatpush1.xpose.msra.mxu0 %v1937
  %2098 = vmatprep.subr.mxu0 0.0
  %2099 = vmatpush1.xpose.msra.mxu0 %v1940
  %2100 = vmatprep.subr.mxu0 0.0
  %2101 = vmatpush1.xpose.msra.mxu0 %v1943
  %2102 = vmatprep.subr.mxu0 0.0
  %2103 = vmatpush1.xpose.msra.mxu0 %v1946
  %2104 = vmatprep.subr.mxu0 0.0
  %2105 = vmatpush1.xpose.msra.mxu0 %v1949
  %2106 = vmatprep.subr.mxu0 0.0
  %2107 = vmatpush1.xpose.msra.mxu0 %v1952
  %2108 = vmatprep.subr.mxu0 0.0
  %2109 = vmatpush1.xpose.msra.mxu0 %v1955
  %2110 = vmatprep.subr.mxu0 0.0
  %2111 = vmatpush1.xpose.msra.mxu0 %v1958
  %2112 = vmatprep.subr.mxu0 0.0
  %2113 = vmatpush1.xpose.msra.mxu0 %v1961
  %2114 = vmatprep.subr.mxu0 0.0
  %2115 = vmatpush1.xpose.msra.mxu0 %v1964
  %2116 = vmatprep.subr.mxu0 0.0
  %2117 = vmatpush1.xpose.msra.mxu0 %v1967
  %2118 = vmatprep.subr.mxu0 0.0
  %2119 = vmatpush1.xpose.msra.mxu0 %v1970
  %2120 = vmatprep.subr.mxu0 0.0
  %2121 = vmatpush1.xpose.msra.mxu0 %v1973
  %2122 = vmatprep.subr.mxu0 0.0
  %2123 = vmatpush1.xpose.msra.mxu0 %v1976
  %2124 = vmatprep.subr.mxu0 0.0
  %2125 = vmatpush1.xpose.msra.mxu0 %v1979
  %2126 = vmatprep.subr.mxu0 0.0
  %2127 = vmatpush1.xpose.msra.mxu0 %v1982
  %2128 = vmatprep.subr.mxu0 0.0
  %2129 = vmatpush1.xpose.msra.mxu0 %v1985
  %2130 = vmatprep.subr.mxu0 0.0
  %2131 = vmatpush1.xpose.msra.mxu0 %v1988
  %2132 = vmatprep.subr.mxu0 0.0
  %2133 = vmatpush1.xpose.msra.mxu0 %v1991
  %2134 = vmatprep.subr.mxu0 0.0
  %2135 = vmatpush1.xpose.msra.mxu0 %v1994
  %2136 = vmatprep.subr.mxu0 0.0
  %2137 = vmatpush1.xpose.msra.mxu0 %v1997
  %2138 = vmatprep.subr.mxu0 0.0
  %2139 = vmatpush1.xpose.msra.mxu0 %v2000
  %2140 = vmatprep.subr.mxu0 0.0
  %2141 = vmatpush1.xpose.msra.mxu0 %v2003
  %2142 = vmatprep.subr.mxu0 0.0
  %2143 = vmatpush1.xpose.msra.mxu0 %v2006
  %2144 = vmatprep.subr.mxu0 0.0
  %2145 = vmatpush1.xpose.msra.mxu0 %v2009
  %2146 = vmatprep.mubr.f32.mxu0 0.0
  %2147 = vmatmul.mubr.f32.gmra.mrb[0].mxu0 %v1817
  %v2148 = vpop.f32.mrb[0].mxu0
  %v2149 = vadd.f32 0.0, %v2148
  %v2150 = vpop.f32.mrb[0].mxu0
  %v2151 = vadd.f32 0.0, %v2150
  %2152 = vdwg.mxu0
  %2153 = vst [vmem:[%s13] sm:$0xff] %v2078
  %2154 = vst [vmem:[%s13 + $0x8] sm:$0xff] %v2080
  %2155 = vst [vmem:[%s13 + $0x10] sm:$0xff] %v2149
  %2156 = vst [vmem:[%s13 + $0x18] sm:$0xff] %v2151
  // Predicated region
  $region54: #{model_forward.1} parent=0 // pred_check
    _
  $region55: #{model_forward.1} parent=0 // pred_check_branch
    %2158 = sbr.rel (0) target = $region57
  $region56: #{model_forward.1} parent=0 // pred_region
    _
  $region57: #{model_forward.1} parent=0 // pred_fallthru
    _
  // Predicated region
  $region58: #{model_forward.1} parent=0 // pred_check
    _
  $region59: #{model_forward.1} parent=0 // pred_check_branch
    %2160 = sbr.rel (0) target = $region61
  $region60: #{model_forward.1} parent=0 // pred_region
    _
  $region61: #{model_forward.1} parent=0 // pred_fallthru
    _

</llo_original>
